<compile_context>
chip_gen: v5e
topology: v5e:2x2
jax: 0.10.0
libtpu: 0.0.40
codegen_flags: <defaults>
</compile_context>

<pallas_src>
import functools

import jax
import jax.numpy as jnp
import numpy as np
from jax.experimental import pallas as pl
from jax.experimental.pallas import tpu as pltpu


def _odeconv_kernel(t_ref, x_ref, w1x_ref, w1t_ref, b1_ref,
                    w2c_ref, w2t_ref, b2_ref, mask_ref,
                    w3x_ref, w3t_ref, b3_ref,
                    out_ref, stack_ref, *, W):
    # t_ref:    SMEM (1,) f32
    # x_ref:    (C, N) f32   channel-major, N = images_per_block * H * W
    # w1x_ref:  (F, C) f32, w1t_ref/b1_ref: (F, 1) f32
    # w2c_ref:  (F, 9*F) bf16 (tap-major), w2t_ref: (F, 9) f32, b2_ref: (F, 1) f32
    # mask_ref: (9, N) f32 0/1 source-validity mask per tap
    # w3x_ref:  (C, F) bf16, w3t_ref/b3_ref: (C, 1) f32
    # out_ref:  (C, N) f32
    # stack_ref: VMEM (9*F, N) bf16 scratch (im2col stack)
    C, N = x_ref.shape
    F = w1x_ref.shape[0]
    t = t_ref[0]

    x = x_ref[...]                                   # (C, N) f32
    mask = mask_ref[...]                             # (9, N) f32, 0/1

    # ---- conv1 (1x1) + ReLU: K = C is tiny -> VPU broadcast multiply-adds ---
    h1 = t * w1t_ref[...] + b1_ref[...]              # (F, 1), broadcasts below
    for c in range(C):
        h1 = h1 + w1x_ref[:, c:c + 1] * x[c:c + 1, :]
    h1 = jnp.maximum(h1, 0.0)                        # (F, N) f32

    # ---- conv2 (3x3, padding=1) + ReLU ---------------------------------------
    # Tap k = (ky, kx): output pixel p reads source pixel p + d (d = dy*W + dx)
    # iff that source is inside the same image; mask[k, p] is exactly that 0/1
    # validity, so a full-width lane rotation (pltpu.roll, XLU slot) followed
    # by the f32 mask multiply (VPU) reproduces the zero-padded tap exactly,
    # including every row/image wrap-around of the flat shift.  Each tap is
    # one unmasked, lane-dense, sublane-aligned store into the im2col stack.
    for k in range(9):
        dy, dx = k // 3 - 1, k % 3 - 1
        d = dy * W + dx
        r0 = k * F
        if d == 0:
            tap = h1                                  # center tap: mask == 1
        else:
            tap = pltpu.roll(h1, shift=(-d) % N, axis=1) * mask[k:k + 1, :]
        stack_ref[r0:r0 + F, :] = tap.astype(stack_ref.dtype)

    # Single K = 9*F matmul over the full im2col stack (bf16 MXU, f32 acc).
    h2 = jnp.dot(w2c_ref[...], stack_ref[...],
                 preferred_element_type=jnp.float32)  # (F, N) f32

    # t-channel of conv2 (zero padding of the constant-t plane), recomputed on
    # the VPU from the tiny (F, 9) weight instead of DMA-ing an (F, N) map.
    tw2 = t * w2t_ref[...]                            # (F, 9) f32
    tmap = tw2[:, 0:1] * mask[0:1, :]
    for k in range(1, 9):
        tmap = tmap + tw2[:, k:k + 1] * mask[k:k + 1, :]
    h2 = jnp.maximum(h2 + tmap + b2_ref[...], 0.0)

    # ---- conv3 (1x1), no activation: K = F = 32 -> MXU -----------------------
    out = jnp.dot(w3x_ref[...], h2.astype(w3x_ref.dtype),
                  preferred_element_type=jnp.float32)  # (C, N) f32
    out_ref[...] = out + t * w3t_ref[...] + b3_ref[...]


def prepare_params(params, batch, height, width, *, images_per_block=None,
                   compute_dtype=jnp.bfloat16):
    """One-time (per ODE solve / param set) weight preparation.

    Parameter layout (same convention as ref_forward below):
      w1: (C+1, F)  row 0 = t channel        b1: (F,)
      w2: (3, 3, F+1, F) HWIO, input 0 = t   b2: (F,)
      w3: (F+1, C)  row 0 = t channel        b3: (C,)
    """
    w1, b1, w2, b2, w3, b3 = params
    F = b1.shape[0]
    C = b3.shape[0]
    H, W, HW = height, width, height * width
    if images_per_block is None:
        images_per_block = batch

    # 0/1 source-pixel validity per tap (depends only on H, W); f32 so the
    # per-tap multiply stays in f32 (native on v5e's VPU, fine everywhere).
    ys, xs = np.meshgrid(np.arange(H), np.arange(W), indexing="ij")
    mask9 = np.stack(
        [((ys + ky - 1 >= 0) & (ys + ky - 1 < H) &
          (xs + kx - 1 >= 0) & (xs + kx - 1 < W)).reshape(HW)
         for ky in range(3) for kx in range(3)], axis=0).astype(np.float32)
    mask = jnp.asarray(np.tile(mask9, (1, images_per_block)), jnp.float32)

    # 1x1 convs: split the t row.  conv1 weights stay f32 (VPU path).
    w1x = jnp.asarray(w1[1:, :].T, jnp.float32)                  # (F, C)
    w1t = jnp.asarray(w1[0, :], jnp.float32).reshape(F, 1)
    b1c = jnp.asarray(b1, jnp.float32).reshape(F, 1)
    w3x = jnp.asarray(w3[1:, :].T, compute_dtype)                # (C, F)
    w3t = jnp.asarray(w3[0, :], jnp.float32).reshape(C, 1)
    b3c = jnp.asarray(b3, jnp.float32).reshape(C, 1)
    b2c = jnp.asarray(b2, jnp.float32).reshape(F, 1)

    # 3x3 conv: tap-major concatenated weights (F_out, 9*F_in) for the single
    # K=9F matmul, and the tiny per-tap t-channel weights (F_out, 9).
    w2x = jnp.asarray(w2)[:, :, 1:, :].reshape(9, F, F)          # (tap, in, out)
    w2c = jnp.asarray(jnp.transpose(w2x, (2, 0, 1)).reshape(F, 9 * F),
                      compute_dtype)
    w2t = jnp.asarray(jnp.asarray(w2)[:, :, 0, :].reshape(9, F).T,
                      jnp.float32)                               # (F, 9)

    return (w1x, w1t, b1c, w2c, w2t, b2c, mask, w3x, w3t, b3c)


def _default_num_blocks(batch):
    """Batch grid only on v7x (2 TensorCores/chip); single block on v5e/v6e."""
    try:
        kind = jax.devices()[0].device_kind.lower()
    except Exception:
        return 1
    if "v7" in kind or "7x" in kind:
        return batch
    return 1


def odeconv_forward(t, x_nchw, prepped):
    """Fused ODEConv forward.  x_nchw is PyTorch-layout (B, C, H, W) float32."""
    w1x, w1t, b1c, w2c, w2t, b2c, mask, w3x, w3t, b3c = prepped
    B, C, H, W = x_nchw.shape
    HW = H * W
    N = B * HW
    F = b1c.shape[0]

    blk = mask.shape[1]                      # lane width per grid block
    assert N % blk == 0 and blk % HW == 0 and blk % 128 == 0
    num_blocks = N // blk

    t_arr = jnp.asarray(t, jnp.float32).reshape(1)
    # Channel-major (C, B*HW): tiny wrapper transpose, keeps every kernel
    # load/store lane-dense and makes the per-image grid split trivial.
    x = jnp.transpose(jnp.asarray(x_nchw, jnp.float32),
                      (1, 0, 2, 3)).reshape(C, N)

    full_vmem = pl.BlockSpec(memory_space=pltpu.MemorySpace.VMEM)

    # im2col scratch is 9x the hidden activation (9*F x blk bf16, ~0.3 MiB
    # here).  If B/H/W grow, shrink images_per_block (more grid blocks) well
    # before this approaches v7x's 64 MiB physical / 32 MiB scoped VMEM.
    out = pl.pallas_call(
        functools.partial(_odeconv_kernel, W=W),
        out_shape=jax.ShapeDtypeStruct((C, N), jnp.float32),
        grid=(num_blocks,),
        in_specs=[
            pl.BlockSpec(memory_space=pltpu.MemorySpace.SMEM),   # t (scalar)
            pl.BlockSpec((C, blk), lambda i: (0, i)),            # x
            full_vmem, full_vmem, full_vmem,                     # w1x, w1t, b1
            full_vmem, full_vmem, full_vmem, full_vmem,          # w2c, w2t, b2, mask
            full_vmem, full_vmem, full_vmem,                     # w3x, w3t, b3
        ],
        out_specs=pl.BlockSpec((C, blk), lambda i: (0, i)),
        scratch_shapes=[pltpu.VMEM((9 * F, blk), jnp.bfloat16)],
        compiler_params=pltpu.CompilerParams(
            dimension_semantics=("parallel",),
            vmem_limit_bytes=32 * 1024 * 1024),
    )(t_arr, x, w1x, w1t, b1c, w2c, w2t, b2c, mask, w3x, w3t, b3c)

    return jnp.transpose(out.reshape(C, B, H, W), (1, 0, 2, 3))


def ref_forward(t, x_nchw, params):
    """Pure-JAX reference (NHWC lax.conv), mirrors Conv2dTime/ODEConv exactly."""
    w1, b1, w2, b2, w3, b3 = params
    x = jnp.transpose(x_nchw, (0, 2, 3, 1))

    def conv_time(t, x, w_hwio, b, pad):
        t_img = jnp.full(x.shape[:-1] + (1,), t, x.dtype)
        xin = jnp.concatenate([t_img, x], axis=-1)
        out = jax.lax.conv_general_dilated(
            xin, w_hwio, (1, 1), [(pad, pad), (pad, pad)],
            dimension_numbers=("NHWC", "HWIO", "NHWC"),
            precision=jax.lax.Precision.HIGHEST)
        return out + b

    h = jax.nn.relu(conv_time(t, x, w1.reshape(1, 1, *w1.shape), b1, 0))
    h = jax.nn.relu(conv_time(t, h, w2, b2, 1))
    out = conv_time(t, h, w3.reshape(1, 1, *w3.shape), b3, 0)
    return jnp.transpose(out, (0, 3, 1, 2))


if __name__ == "__main__":
    # ODEConv(in_channels=4, num_filters=32, augmented_dim=2)
    in_channels, num_filters, augmented_dim = 4, 32, 2
    C = in_channels + augmented_dim          # ODE state channels
    F = num_filters
    B, H, W = 2, 16, 16

    key = jax.random.PRNGKey(0)
    k = jax.random.split(key, 8)
    # Deterministic synthetic parameters (shapes follow the nn.Module __init__).
    # w1[c_in, c_out] == torch w1[c_out, c_in, 0, 0];
    # w2[ky, kx, c_in, c_out] == torch w2[c_out, c_in, ky, kx]; input index 0 = t.
    w1 = 0.1 * jax.random.normal(k[0], (C + 1, F), jnp.float32)
    b1 = 0.1 * jax.random.normal(k[1], (F,), jnp.float32)
    w2 = 0.1 * jax.random.normal(k[2], (3, 3, F + 1, F), jnp.float32)
    b2 = 0.1 * jax.random.normal(k[3], (F,), jnp.float32)
    w3 = 0.1 * jax.random.normal(k[4], (F + 1, C), jnp.float32)
    b3 = 0.1 * jax.random.normal(k[5], (C,), jnp.float32)
    params = (w1, b1, w2, b2, w3, b3)

    x = jax.random.normal(k[6], (B, C, H, W), jnp.float32)   # NCHW like PyTorch
    t = jnp.float32(0.5)

    # Weight prep hoisted (once per ODE solve); batch grid only on v7x.
    num_blocks = _default_num_blocks(B)
    prepped = prepare_params(params, B, H, W, images_per_block=B // num_blocks)
    fwd = jax.jit(odeconv_forward)

    # TODO(synk): self.nfe (forward-call counter) is host-side Python state, not kernel work.
    out = jax.block_until_ready(fwd(t, x, prepped))
    ref = jax.block_until_ready(ref_forward(t, x, params))

    assert out.shape == (B, C, H, W), out.shape
    # bf16 MXU inputs (conv2/conv3) with f32 accumulation => ~1e-3..1e-2
    # deviation from the f32 HIGHEST-precision reference; tolerance sized for
    # that (logic errors would show at ~0.1-1.0 and still be caught).
    np.testing.assert_allclose(np.asarray(out), np.asarray(ref),
                               rtol=1e-2, atol=1e-2)
    print("KERNEL_OK")
</pallas_src>

<mosaic_0001>
module attributes {stable_mosaic.version = 11 : i64} {
  func.func @_odeconv_kernel(%arg0: i32, %arg1: memref<1xf32, #tpu.memory_space<smem>>, %arg2: memref<6x512xf32, #tpu.memory_space<vmem>>, %arg3: memref<32x6xf32, #tpu.memory_space<vmem>>, %arg4: memref<32x1xf32, #tpu.memory_space<vmem>>, %arg5: memref<32x1xf32, #tpu.memory_space<vmem>>, %arg6: memref<32x288xbf16, #tpu.memory_space<vmem>>, %arg7: memref<32x9xf32, #tpu.memory_space<vmem>>, %arg8: memref<32x1xf32, #tpu.memory_space<vmem>>, %arg9: memref<9x512xf32, #tpu.memory_space<vmem>>, %arg10: memref<6x32xbf16, #tpu.memory_space<vmem>>, %arg11: memref<6x1xf32, #tpu.memory_space<vmem>>, %arg12: memref<6x1xf32, #tpu.memory_space<vmem>>, %arg13: memref<6x512xf32, #tpu.memory_space<vmem>>, %arg14: memref<288x512xbf16, #tpu.memory_space<vmem>>) attributes {dimension_semantics = [#tpu.dimension_semantics<parallel>], iteration_bounds = array<i64: 1>, scalar_prefetch = 0 : i64, scratch_operands = 1 : i64, tpu.core_type = #tpu.core_type<tc>, window_params = [{transform_indices = @transform_0, window_bounds = array<i64: 1>}, {transform_indices = @transform_1, window_bounds = array<i64: 6, 512>}, {pipeline_mode = #tpu.pipeline_mode<synchronous>, transform_indices = @transform_2, window_bounds = array<i64: 32, 6>}, {pipeline_mode = #tpu.pipeline_mode<synchronous>, transform_indices = @transform_3, window_bounds = array<i64: 32, 1>}, {pipeline_mode = #tpu.pipeline_mode<synchronous>, transform_indices = @transform_4, window_bounds = array<i64: 32, 1>}, {pipeline_mode = #tpu.pipeline_mode<synchronous>, transform_indices = @transform_5, window_bounds = array<i64: 32, 288>}, {pipeline_mode = #tpu.pipeline_mode<synchronous>, transform_indices = @transform_6, window_bounds = array<i64: 32, 9>}, {pipeline_mode = #tpu.pipeline_mode<synchronous>, transform_indices = @transform_7, window_bounds = array<i64: 32, 1>}, {pipeline_mode = #tpu.pipeline_mode<synchronous>, transform_indices = @transform_8, window_bounds = array<i64: 9, 512>}, {pipeline_mode = #tpu.pipeline_mode<synchronous>, transform_indices = @transform_9, window_bounds = array<i64: 6, 32>}, {pipeline_mode = #tpu.pipeline_mode<synchronous>, transform_indices = @transform_10, window_bounds = array<i64: 6, 1>}, {pipeline_mode = #tpu.pipeline_mode<synchronous>, transform_indices = @transform_11, window_bounds = array<i64: 6, 1>}, {transform_indices = @transform_12, window_bounds = array<i64: 6, 512>}]} {
    %c0 = arith.constant 0 : index
    %0 = memref.load %arg1[%c0] : memref<1xf32, #tpu.memory_space<smem>>
    %c0_0 = arith.constant 0 : index
    %c0_1 = arith.constant 0 : index
    %1 = vector.load %arg2[%c0_0, %c0_1] : memref<6x512xf32, #tpu.memory_space<vmem>>, vector<6x512xf32>
    %c0_2 = arith.constant 0 : index
    %c0_3 = arith.constant 0 : index
    %2 = vector.load %arg9[%c0_2, %c0_3] : memref<9x512xf32, #tpu.memory_space<vmem>>, vector<9x512xf32>
    %c0_4 = arith.constant 0 : index
    %c0_5 = arith.constant 0 : index
    %3 = vector.load %arg4[%c0_4, %c0_5] : memref<32x1xf32, #tpu.memory_space<vmem>>, vector<32x1xf32>
    %4 = vector.broadcast %0 : f32 to vector<32x1xf32>
    %5 = arith.mulf %4, %3 : vector<32x1xf32>
    %c0_6 = arith.constant 0 : index
    %c0_7 = arith.constant 0 : index
    %6 = vector.load %arg5[%c0_6, %c0_7] : memref<32x1xf32, #tpu.memory_space<vmem>>, vector<32x1xf32>
    %7 = arith.addf %5, %6 : vector<32x1xf32>
    %c0_8 = arith.constant 0 : index
    %c0_9 = arith.constant 0 : index
    %8 = vector.load %arg3[%c0_8, %c0_9] : memref<32x6xf32, #tpu.memory_space<vmem>>, vector<32x1xf32>
    %9 = vector.extract_strided_slice %1 {offsets = [0, 0], sizes = [1, 512], strides = [1, 1]} : vector<6x512xf32> to vector<1x512xf32>
    %10 = vector.broadcast %8 : vector<32x1xf32> to vector<32x512xf32>
    %11 = vector.broadcast %9 : vector<1x512xf32> to vector<32x512xf32>
    %12 = arith.mulf %10, %11 : vector<32x512xf32>
    %13 = vector.broadcast %7 : vector<32x1xf32> to vector<32x512xf32>
    %14 = arith.addf %13, %12 : vector<32x512xf32>
    %c0_10 = arith.constant 0 : index
    %c1 = arith.constant 1 : index
    %15 = vector.load %arg3[%c0_10, %c1] : memref<32x6xf32, #tpu.memory_space<vmem>>, vector<32x1xf32>
    %16 = vector.extract_strided_slice %1 {offsets = [1, 0], sizes = [1, 512], strides = [1, 1]} : vector<6x512xf32> to vector<1x512xf32>
    %17 = vector.broadcast %15 : vector<32x1xf32> to vector<32x512xf32>
    %18 = vector.broadcast %16 : vector<1x512xf32> to vector<32x512xf32>
    %19 = arith.mulf %17, %18 : vector<32x512xf32>
    %20 = arith.addf %14, %19 : vector<32x512xf32>
    %c0_11 = arith.constant 0 : index
    %c2 = arith.constant 2 : index
    %21 = vector.load %arg3[%c0_11, %c2] : memref<32x6xf32, #tpu.memory_space<vmem>>, vector<32x1xf32>
    %22 = vector.extract_strided_slice %1 {offsets = [2, 0], sizes = [1, 512], strides = [1, 1]} : vector<6x512xf32> to vector<1x512xf32>
    %23 = vector.broadcast %21 : vector<32x1xf32> to vector<32x512xf32>
    %24 = vector.broadcast %22 : vector<1x512xf32> to vector<32x512xf32>
    %25 = arith.mulf %23, %24 : vector<32x512xf32>
    %26 = arith.addf %20, %25 : vector<32x512xf32>
    %c0_12 = arith.constant 0 : index
    %c3 = arith.constant 3 : index
    %27 = vector.load %arg3[%c0_12, %c3] : memref<32x6xf32, #tpu.memory_space<vmem>>, vector<32x1xf32>
    %28 = vector.extract_strided_slice %1 {offsets = [3, 0], sizes = [1, 512], strides = [1, 1]} : vector<6x512xf32> to vector<1x512xf32>
    %29 = vector.broadcast %27 : vector<32x1xf32> to vector<32x512xf32>
    %30 = vector.broadcast %28 : vector<1x512xf32> to vector<32x512xf32>
    %31 = arith.mulf %29, %30 : vector<32x512xf32>
    %32 = arith.addf %26, %31 : vector<32x512xf32>
    %c0_13 = arith.constant 0 : index
    %c4 = arith.constant 4 : index
    %33 = vector.load %arg3[%c0_13, %c4] : memref<32x6xf32, #tpu.memory_space<vmem>>, vector<32x1xf32>
    %34 = vector.extract_strided_slice %1 {offsets = [4, 0], sizes = [1, 512], strides = [1, 1]} : vector<6x512xf32> to vector<1x512xf32>
    %35 = vector.broadcast %33 : vector<32x1xf32> to vector<32x512xf32>
    %36 = vector.broadcast %34 : vector<1x512xf32> to vector<32x512xf32>
    %37 = arith.mulf %35, %36 : vector<32x512xf32>
    %38 = arith.addf %32, %37 : vector<32x512xf32>
    %c0_14 = arith.constant 0 : index
    %c5 = arith.constant 5 : index
    %39 = vector.load %arg3[%c0_14, %c5] : memref<32x6xf32, #tpu.memory_space<vmem>>, vector<32x1xf32>
    %40 = vector.extract_strided_slice %1 {offsets = [5, 0], sizes = [1, 512], strides = [1, 1]} : vector<6x512xf32> to vector<1x512xf32>
    %41 = vector.broadcast %39 : vector<32x1xf32> to vector<32x512xf32>
    %42 = vector.broadcast %40 : vector<1x512xf32> to vector<32x512xf32>
    %43 = arith.mulf %41, %42 : vector<32x512xf32>
    %44 = arith.addf %38, %43 : vector<32x512xf32>
    %cst = arith.constant 0.000000e+00 : f32
    %45 = vector.broadcast %cst : f32 to vector<32x512xf32>
    %46 = arith.maximumf %44, %45 : vector<32x512xf32>
    %c17_i32 = arith.constant 17 : i32
    %47 = tpu.dynamic_rotate %46 by %c17_i32 dim 1 : vector<32x512xf32>, i32 -> vector<32x512xf32>
    %48 = vector.extract_strided_slice %2 {offsets = [0, 0], sizes = [1, 512], strides = [1, 1]} : vector<9x512xf32> to vector<1x512xf32>
    %49 = vector.broadcast %48 : vector<1x512xf32> to vector<32x512xf32>
    %50 = arith.mulf %47, %49 : vector<32x512xf32>
    %51 = arith.truncf %50 : vector<32x512xf32> to vector<32x512xbf16>
    %c0_15 = arith.constant 0 : index
    %c0_16 = arith.constant 0 : index
    %52 = vector.load %arg14[%c0_15, %c0_16] : memref<288x512xbf16, #tpu.memory_space<vmem>>, vector<32x512xbf16>
    tpu.vector_store %arg14[%c0_15, %c0_16], %51 {strides = array<i32>} : memref<288x512xbf16, #tpu.memory_space<vmem>>, vector<32x512xbf16>,
    %c16_i32 = arith.constant 16 : i32
    %53 = tpu.dynamic_rotate %46 by %c16_i32 dim 1 : vector<32x512xf32>, i32 -> vector<32x512xf32>
    %54 = vector.extract_strided_slice %2 {offsets = [1, 0], sizes = [1, 512], strides = [1, 1]} : vector<9x512xf32> to vector<1x512xf32>
    %55 = vector.broadcast %54 : vector<1x512xf32> to vector<32x512xf32>
    %56 = arith.mulf %53, %55 : vector<32x512xf32>
    %57 = arith.truncf %56 : vector<32x512xf32> to vector<32x512xbf16>
    %c32 = arith.constant 32 : index
    %c0_17 = arith.constant 0 : index
    %58 = vector.load %arg14[%c32, %c0_17] : memref<288x512xbf16, #tpu.memory_space<vmem>>, vector<32x512xbf16>
    tpu.vector_store %arg14[%c32, %c0_17], %57 {strides = array<i32>} : memref<288x512xbf16, #tpu.memory_space<vmem>>, vector<32x512xbf16>,
    %c15_i32 = arith.constant 15 : i32
    %59 = tpu.dynamic_rotate %46 by %c15_i32 dim 1 : vector<32x512xf32>, i32 -> vector<32x512xf32>
    %60 = vector.extract_strided_slice %2 {offsets = [2, 0], sizes = [1, 512], strides = [1, 1]} : vector<9x512xf32> to vector<1x512xf32>
    %61 = vector.broadcast %60 : vector<1x512xf32> to vector<32x512xf32>
    %62 = arith.mulf %59, %61 : vector<32x512xf32>
    %63 = arith.truncf %62 : vector<32x512xf32> to vector<32x512xbf16>
    %c64 = arith.constant 64 : index
    %c0_18 = arith.constant 0 : index
    %64 = vector.load %arg14[%c64, %c0_18] : memref<288x512xbf16, #tpu.memory_space<vmem>>, vector<32x512xbf16>
    tpu.vector_store %arg14[%c64, %c0_18], %63 {strides = array<i32>} : memref<288x512xbf16, #tpu.memory_space<vmem>>, vector<32x512xbf16>,
    %c1_i32 = arith.constant 1 : i32
    %65 = tpu.dynamic_rotate %46 by %c1_i32 dim 1 : vector<32x512xf32>, i32 -> vector<32x512xf32>
    %66 = vector.extract_strided_slice %2 {offsets = [3, 0], sizes = [1, 512], strides = [1, 1]} : vector<9x512xf32> to vector<1x512xf32>
    %67 = vector.broadcast %66 : vector<1x512xf32> to vector<32x512xf32>
    %68 = arith.mulf %65, %67 : vector<32x512xf32>
    %69 = arith.truncf %68 : vector<32x512xf32> to vector<32x512xbf16>
    %c96 = arith.constant 96 : index
    %c0_19 = arith.constant 0 : index
    %70 = vector.load %arg14[%c96, %c0_19] : memref<288x512xbf16, #tpu.memory_space<vmem>>, vector<32x512xbf16>
    tpu.vector_store %arg14[%c96, %c0_19], %69 {strides = array<i32>} : memref<288x512xbf16, #tpu.memory_space<vmem>>, vector<32x512xbf16>,
    %71 = arith.truncf %46 : vector<32x512xf32> to vector<32x512xbf16>
    %c128 = arith.constant 128 : index
    %c0_20 = arith.constant 0 : index
    %72 = vector.load %arg14[%c128, %c0_20] : memref<288x512xbf16, #tpu.memory_space<vmem>>, vector<32x512xbf16>
    tpu.vector_store %arg14[%c128, %c0_20], %71 {strides = array<i32>} : memref<288x512xbf16, #tpu.memory_space<vmem>>, vector<32x512xbf16>,
    %c511_i32 = arith.constant 511 : i32
    %73 = tpu.dynamic_rotate %46 by %c511_i32 dim 1 : vector<32x512xf32>, i32 -> vector<32x512xf32>
    %74 = vector.extract_strided_slice %2 {offsets = [5, 0], sizes = [1, 512], strides = [1, 1]} : vector<9x512xf32> to vector<1x512xf32>
    %75 = vector.broadcast %74 : vector<1x512xf32> to vector<32x512xf32>
    %76 = arith.mulf %73, %75 : vector<32x512xf32>
    %77 = arith.truncf %76 : vector<32x512xf32> to vector<32x512xbf16>
    %c160 = arith.constant 160 : index
    %c0_21 = arith.constant 0 : index
    %78 = vector.load %arg14[%c160, %c0_21] : memref<288x512xbf16, #tpu.memory_space<vmem>>, vector<32x512xbf16>
    tpu.vector_store %arg14[%c160, %c0_21], %77 {strides = array<i32>} : memref<288x512xbf16, #tpu.memory_space<vmem>>, vector<32x512xbf16>,
    %c497_i32 = arith.constant 497 : i32
    %79 = tpu.dynamic_rotate %46 by %c497_i32 dim 1 : vector<32x512xf32>, i32 -> vector<32x512xf32>
    %80 = vector.extract_strided_slice %2 {offsets = [6, 0], sizes = [1, 512], strides = [1, 1]} : vector<9x512xf32> to vector<1x512xf32>
    %81 = vector.broadcast %80 : vector<1x512xf32> to vector<32x512xf32>
    %82 = arith.mulf %79, %81 : vector<32x512xf32>
    %83 = arith.truncf %82 : vector<32x512xf32> to vector<32x512xbf16>
    %c192 = arith.constant 192 : index
    %c0_22 = arith.constant 0 : index
    %84 = vector.load %arg14[%c192, %c0_22] : memref<288x512xbf16, #tpu.memory_space<vmem>>, vector<32x512xbf16>
    tpu.vector_store %arg14[%c192, %c0_22], %83 {strides = array<i32>} : memref<288x512xbf16, #tpu.memory_space<vmem>>, vector<32x512xbf16>,
    %c496_i32 = arith.constant 496 : i32
    %85 = tpu.dynamic_rotate %46 by %c496_i32 dim 1 : vector<32x512xf32>, i32 -> vector<32x512xf32>
    %86 = vector.extract_strided_slice %2 {offsets = [7, 0], sizes = [1, 512], strides = [1, 1]} : vector<9x512xf32> to vector<1x512xf32>
    %87 = vector.broadcast %86 : vector<1x512xf32> to vector<32x512xf32>
    %88 = arith.mulf %85, %87 : vector<32x512xf32>
    %89 = arith.truncf %88 : vector<32x512xf32> to vector<32x512xbf16>
    %c224 = arith.constant 224 : index
    %c0_23 = arith.constant 0 : index
    %90 = vector.load %arg14[%c224, %c0_23] : memref<288x512xbf16, #tpu.memory_space<vmem>>, vector<32x512xbf16>
    tpu.vector_store %arg14[%c224, %c0_23], %89 {strides = array<i32>} : memref<288x512xbf16, #tpu.memory_space<vmem>>, vector<32x512xbf16>,
    %c495_i32 = arith.constant 495 : i32
    %91 = tpu.dynamic_rotate %46 by %c495_i32 dim 1 : vector<32x512xf32>, i32 -> vector<32x512xf32>
    %92 = vector.extract_strided_slice %2 {offsets = [8, 0], sizes = [1, 512], strides = [1, 1]} : vector<9x512xf32> to vector<1x512xf32>
    %93 = vector.broadcast %92 : vector<1x512xf32> to vector<32x512xf32>
    %94 = arith.mulf %91, %93 : vector<32x512xf32>
    %95 = arith.truncf %94 : vector<32x512xf32> to vector<32x512xbf16>
    %c256 = arith.constant 256 : index
    %c0_24 = arith.constant 0 : index
    %96 = vector.load %arg14[%c256, %c0_24] : memref<288x512xbf16, #tpu.memory_space<vmem>>, vector<32x512xbf16>
    tpu.vector_store %arg14[%c256, %c0_24], %95 {strides = array<i32>} : memref<288x512xbf16, #tpu.memory_space<vmem>>, vector<32x512xbf16>,
    %c0_25 = arith.constant 0 : index
    %c0_26 = arith.constant 0 : index
    %97 = vector.load %arg6[%c0_25, %c0_26] : memref<32x288xbf16, #tpu.memory_space<vmem>>, vector<32x288xbf16>
    %c0_27 = arith.constant 0 : index
    %c0_28 = arith.constant 0 : index
    %98 = vector.load %arg14[%c0_27, %c0_28] : memref<288x512xbf16, #tpu.memory_space<vmem>>, vector<288x512xbf16>
    %cst_29 = arith.constant dense<0.000000e+00> : vector<32x512xf32>
    %99 = tpu.matmul %97, %98, %cst_29 {dimension_numbers = #tpu.dot_dimension_numbers<[1], [0], [0], [1], [0, 0, 1, 1], [], []>} : vector<32x288xbf16>, vector<288x512xbf16>, vector<32x512xf32> -> vector<32x512xf32>
    %c0_30 = arith.constant 0 : index
    %c0_31 = arith.constant 0 : index
    %100 = vector.load %arg7[%c0_30, %c0_31] : memref<32x9xf32, #tpu.memory_space<vmem>>, vector<32x9xf32>
    %101 = vector.broadcast %0 : f32 to vector<32x9xf32>
    %102 = arith.mulf %101, %100 : vector<32x9xf32>
    %103 = vector.extract_strided_slice %102 {offsets = [0, 0], sizes = [32, 1], strides = [1, 1]} : vector<32x9xf32> to vector<32x1xf32>
    %104 = vector.extract_strided_slice %2 {offsets = [0, 0], sizes = [1, 512], strides = [1, 1]} : vector<9x512xf32> to vector<1x512xf32>
    %105 = vector.broadcast %103 : vector<32x1xf32> to vector<32x512xf32>
    %106 = vector.broadcast %104 : vector<1x512xf32> to vector<32x512xf32>
    %107 = arith.mulf %105, %106 : vector<32x512xf32>
    %108 = vector.extract_strided_slice %102 {offsets = [0, 1], sizes = [32, 1], strides = [1, 1]} : vector<32x9xf32> to vector<32x1xf32>
    %109 = vector.extract_strided_slice %2 {offsets = [1, 0], sizes = [1, 512], strides = [1, 1]} : vector<9x512xf32> to vector<1x512xf32>
    %110 = vector.broadcast %108 : vector<32x1xf32> to vector<32x512xf32>
    %111 = vector.broadcast %109 : vector<1x512xf32> to vector<32x512xf32>
    %112 = arith.mulf %110, %111 : vector<32x512xf32>
    %113 = arith.addf %107, %112 : vector<32x512xf32>
    %114 = vector.extract_strided_slice %102 {offsets = [0, 2], sizes = [32, 1], strides = [1, 1]} : vector<32x9xf32> to vector<32x1xf32>
    %115 = vector.extract_strided_slice %2 {offsets = [2, 0], sizes = [1, 512], strides = [1, 1]} : vector<9x512xf32> to vector<1x512xf32>
    %116 = vector.broadcast %114 : vector<32x1xf32> to vector<32x512xf32>
    %117 = vector.broadcast %115 : vector<1x512xf32> to vector<32x512xf32>
    %118 = arith.mulf %116, %117 : vector<32x512xf32>
    %119 = arith.addf %113, %118 : vector<32x512xf32>
    %120 = vector.extract_strided_slice %102 {offsets = [0, 3], sizes = [32, 1], strides = [1, 1]} : vector<32x9xf32> to vector<32x1xf32>
    %121 = vector.extract_strided_slice %2 {offsets = [3, 0], sizes = [1, 512], strides = [1, 1]} : vector<9x512xf32> to vector<1x512xf32>
    %122 = vector.broadcast %120 : vector<32x1xf32> to vector<32x512xf32>
    %123 = vector.broadcast %121 : vector<1x512xf32> to vector<32x512xf32>
    %124 = arith.mulf %122, %123 : vector<32x512xf32>
    %125 = arith.addf %119, %124 : vector<32x512xf32>
    %126 = vector.extract_strided_slice %102 {offsets = [0, 4], sizes = [32, 1], strides = [1, 1]} : vector<32x9xf32> to vector<32x1xf32>
    %127 = vector.extract_strided_slice %2 {offsets = [4, 0], sizes = [1, 512], strides = [1, 1]} : vector<9x512xf32> to vector<1x512xf32>
    %128 = vector.broadcast %126 : vector<32x1xf32> to vector<32x512xf32>
    %129 = vector.broadcast %127 : vector<1x512xf32> to vector<32x512xf32>
    %130 = arith.mulf %128, %129 : vector<32x512xf32>
    %131 = arith.addf %125, %130 : vector<32x512xf32>
    %132 = vector.extract_strided_slice %102 {offsets = [0, 5], sizes = [32, 1], strides = [1, 1]} : vector<32x9xf32> to vector<32x1xf32>
    %133 = vector.extract_strided_slice %2 {offsets = [5, 0], sizes = [1, 512], strides = [1, 1]} : vector<9x512xf32> to vector<1x512xf32>
    %134 = vector.broadcast %132 : vector<32x1xf32> to vector<32x512xf32>
    %135 = vector.broadcast %133 : vector<1x512xf32> to vector<32x512xf32>
    %136 = arith.mulf %134, %135 : vector<32x512xf32>
    %137 = arith.addf %131, %136 : vector<32x512xf32>
    %138 = vector.extract_strided_slice %102 {offsets = [0, 6], sizes = [32, 1], strides = [1, 1]} : vector<32x9xf32> to vector<32x1xf32>
    %139 = vector.extract_strided_slice %2 {offsets = [6, 0], sizes = [1, 512], strides = [1, 1]} : vector<9x512xf32> to vector<1x512xf32>
    %140 = vector.broadcast %138 : vector<32x1xf32> to vector<32x512xf32>
    %141 = vector.broadcast %139 : vector<1x512xf32> to vector<32x512xf32>
    %142 = arith.mulf %140, %141 : vector<32x512xf32>
    %143 = arith.addf %137, %142 : vector<32x512xf32>
    %144 = vector.extract_strided_slice %102 {offsets = [0, 7], sizes = [32, 1], strides = [1, 1]} : vector<32x9xf32> to vector<32x1xf32>
    %145 = vector.extract_strided_slice %2 {offsets = [7, 0], sizes = [1, 512], strides = [1, 1]} : vector<9x512xf32> to vector<1x512xf32>
    %146 = vector.broadcast %144 : vector<32x1xf32> to vector<32x512xf32>
    %147 = vector.broadcast %145 : vector<1x512xf32> to vector<32x512xf32>
    %148 = arith.mulf %146, %147 : vector<32x512xf32>
    %149 = arith.addf %143, %148 : vector<32x512xf32>
    %150 = vector.extract_strided_slice %102 {offsets = [0, 8], sizes = [32, 1], strides = [1, 1]} : vector<32x9xf32> to vector<32x1xf32>
    %151 = vector.extract_strided_slice %2 {offsets = [8, 0], sizes = [1, 512], strides = [1, 1]} : vector<9x512xf32> to vector<1x512xf32>
    %152 = vector.broadcast %150 : vector<32x1xf32> to vector<32x512xf32>
    %153 = vector.broadcast %151 : vector<1x512xf32> to vector<32x512xf32>
    %154 = arith.mulf %152, %153 : vector<32x512xf32>
    %155 = arith.addf %149, %154 : vector<32x512xf32>
    %156 = arith.addf %99, %155 : vector<32x512xf32>
    %c0_32 = arith.constant 0 : index
    %c0_33 = arith.constant 0 : index
    %157 = vector.load %arg8[%c0_32, %c0_33] : memref<32x1xf32, #tpu.memory_space<vmem>>, vector<32x1xf32>
    %158 = vector.broadcast %157 : vector<32x1xf32> to vector<32x512xf32>
    %159 = arith.addf %156, %158 : vector<32x512xf32>
    %cst_34 = arith.constant 0.000000e+00 : f32
    %160 = vector.broadcast %cst_34 : f32 to vector<32x512xf32>
    %161 = arith.maximumf %159, %160 : vector<32x512xf32>
    %c0_35 = arith.constant 0 : index
    %c0_36 = arith.constant 0 : index
    %162 = vector.load %arg10[%c0_35, %c0_36] : memref<6x32xbf16, #tpu.memory_space<vmem>>, vector<6x32xbf16>
    %163 = arith.truncf %161 : vector<32x512xf32> to vector<32x512xbf16>
    %cst_37 = arith.constant dense<0.000000e+00> : vector<6x512xf32>
    %164 = tpu.matmul %162, %163, %cst_37 {dimension_numbers = #tpu.dot_dimension_numbers<[1], [0], [0], [1], [0, 0, 1, 1], [], []>} : vector<6x32xbf16>, vector<32x512xbf16>, vector<6x512xf32> -> vector<6x512xf32>
    %c0_38 = arith.constant 0 : index
    %c0_39 = arith.constant 0 : index
    %165 = vector.load %arg11[%c0_38, %c0_39] : memref<6x1xf32, #tpu.memory_space<vmem>>, vector<6x1xf32>
    %166 = vector.broadcast %0 : f32 to vector<6x1xf32>
    %167 = arith.mulf %166, %165 : vector<6x1xf32>
    %168 = vector.broadcast %167 : vector<6x1xf32> to vector<6x512xf32>
    %169 = arith.addf %164, %168 : vector<6x512xf32>
    %c0_40 = arith.constant 0 : index
    %c0_41 = arith.constant 0 : index
    %170 = vector.load %arg12[%c0_40, %c0_41] : memref<6x1xf32, #tpu.memory_space<vmem>>, vector<6x1xf32>
    %171 = vector.broadcast %170 : vector<6x1xf32> to vector<6x512xf32>
    %172 = arith.addf %169, %171 : vector<6x512xf32>
    %c0_42 = arith.constant 0 : index
    %c0_43 = arith.constant 0 : index
    %173 = vector.load %arg13[%c0_42, %c0_43] : memref<6x512xf32, #tpu.memory_space<vmem>>, vector<6x512xf32>
    tpu.vector_store %arg13[%c0_42, %c0_43], %172 {strides = array<i32>} : memref<6x512xf32, #tpu.memory_space<vmem>>, vector<6x512xf32>,
    return
  }
  func.func @transform_0(%arg0: i32) -> i32 {
    %c0_i32 = arith.constant 0 : i32
    %c0_i32_0 = arith.constant 0 : i32
    return %c0_i32 : i32
  }
  func.func @transform_1(%arg0: i32) -> (i32, i32) {
    %c0_i32 = arith.constant 0 : i32
    %c0_i32_0 = arith.constant 0 : i32
    return %c0_i32, %arg0 : i32, i32
  }
  func.func @transform_2(%arg0: i32) -> (i32, i32) {
    %c0_i32 = arith.constant 0 : i32
    %c0_i32_0 = arith.constant 0 : i32
    %c0_i32_1 = arith.constant 0 : i32
    return %c0_i32, %c0_i32_0 : i32, i32
  }
  func.func @transform_3(%arg0: i32) -> (i32, i32) {
    %c0_i32 = arith.constant 0 : i32
    %c0_i32_0 = arith.constant 0 : i32
    %c0_i32_1 = arith.constant 0 : i32
    return %c0_i32, %c0_i32_0 : i32, i32
  }
  func.func @transform_4(%arg0: i32) -> (i32, i32) {
    %c0_i32 = arith.constant 0 : i32
    %c0_i32_0 = arith.constant 0 : i32
    %c0_i32_1 = arith.constant 0 : i32
    return %c0_i32, %c0_i32_0 : i32, i32
  }
  func.func @transform_5(%arg0: i32) -> (i32, i32) {
    %c0_i32 = arith.constant 0 : i32
    %c0_i32_0 = arith.constant 0 : i32
    %c0_i32_1 = arith.constant 0 : i32
    return %c0_i32, %c0_i32_0 : i32, i32
  }
  func.func @transform_6(%arg0: i32) -> (i32, i32) {
    %c0_i32 = arith.constant 0 : i32
    %c0_i32_0 = arith.constant 0 : i32
    %c0_i32_1 = arith.constant 0 : i32
    return %c0_i32, %c0_i32_0 : i32, i32
  }
  func.func @transform_7(%arg0: i32) -> (i32, i32) {
    %c0_i32 = arith.constant 0 : i32
    %c0_i32_0 = arith.constant 0 : i32
    %c0_i32_1 = arith.constant 0 : i32
    return %c0_i32, %c0_i32_0 : i32, i32
  }
  func.func @transform_8(%arg0: i32) -> (i32, i32) {
    %c0_i32 = arith.constant 0 : i32
    %c0_i32_0 = arith.constant 0 : i32
    %c0_i32_1 = arith.constant 0 : i32
    return %c0_i32, %c0_i32_0 : i32, i32
  }
  func.func @transform_9(%arg0: i32) -> (i32, i32) {
    %c0_i32 = arith.constant 0 : i32
    %c0_i32_0 = arith.constant 0 : i32
    %c0_i32_1 = arith.constant 0 : i32
    return %c0_i32, %c0_i32_0 : i32, i32
  }
  func.func @transform_10(%arg0: i32) -> (i32, i32) {
    %c0_i32 = arith.constant 0 : i32
    %c0_i32_0 = arith.constant 0 : i32
    %c0_i32_1 = arith.constant 0 : i32
    return %c0_i32, %c0_i32_0 : i32, i32
  }
  func.func @transform_11(%arg0: i32) -> (i32, i32) {
    %c0_i32 = arith.constant 0 : i32
    %c0_i32_0 = arith.constant 0 : i32
    %c0_i32_1 = arith.constant 0 : i32
    return %c0_i32, %c0_i32_0 : i32, i32
  }
  func.func @transform_12(%arg0: i32) -> (i32, i32) {
    %c0_i32 = arith.constant 0 : i32
    %c0_i32_0 = arith.constant 0 : i32
    return %c0_i32, %arg0 : i32, i32
  }
}

</mosaic_0001>

<llo_original>
// kernel: odeconv_forward.1
$region0: #{odeconv_forward.1}
  #allocation0 [shape = 'u32[]', space=smem, size = 0x4, offset = 0x4, fixed_abs, tag = 'smem constant byte address 0x4 - core index']
  #allocation1 [shape = 'u32[72,128]{1,0:T(1,128)}', space=vmem, size = 0x9000, scoped, tag = 'internal scratch']
  #allocation2 [shape = 'bf16[288,512]{1,0:T(8,128)(2,1)}', space=vmem, size = 0x48000, scoped, tag = 'scratch operand']
  #allocation3 [shape = 'f32[1]{0:T(128)S(6)}', space=smem, size = 0x200, scoped, tag = 'scoped memory for odeconv_forward.1']
  %s0 = inlined_call_operand.<no memory space> [shape: f32[1], index: 0, kind: input, shape index: {}]
  %s1 = inlined_call_operand.vmem [shape: f32[6,512], index: 1, kind: input, shape index: {}]
  %s2 = inlined_call_operand.vmem [shape: f32[32,6], index: 2, kind: input, shape index: {}]
  %s3 = inlined_call_operand.vmem [shape: f32[32,1], index: 3, kind: input, shape index: {}]
  %s4 = inlined_call_operand.vmem [shape: f32[32,1], index: 4, kind: input, shape index: {}]
  %s5 = inlined_call_operand.vmem [shape: bf16[32,288], index: 5, kind: input, shape index: {}]
  %s6 = inlined_call_operand.vmem [shape: f32[32,9], index: 6, kind: input, shape index: {}]
  %s7 = inlined_call_operand.vmem [shape: f32[32,1], index: 7, kind: input, shape index: {}]
  %s8 = inlined_call_operand.vmem [shape: f32[9,512], index: 8, kind: input, shape index: {}]
  %s9 = inlined_call_operand.vmem [shape: bf16[6,32], index: 9, kind: input, shape index: {}]
  %s10 = inlined_call_operand.vmem [shape: f32[6,1], index: 10, kind: input, shape index: {}]
  %s11 = inlined_call_operand.vmem [shape: f32[6,1], index: 11, kind: input, shape index: {}]
  %s12 = inlined_call_operand.vmem [shape: f32[6,512], index: 12, kind: output, shape index: {}]
  %s13 = sld [smem:[#allocation0]]
  $region58: #{odeconv_forward.1} parent=0
    _
  %s15 = ssub.s32 1, %s13
  %s16 = scalar_select 0, %s15, %s13
  %17 = sst [smem:[#allocation3]] %s0
  // Predicated region
  $region2: #{odeconv_forward.1} parent=0 // pred_check
    _
  $region3: #{odeconv_forward.1} parent=0 // pred_check_branch
    %19 = sbr.rel (0) target = $region5
  $region4: #{odeconv_forward.1} parent=0 // pred_region
    _
  $region5: #{odeconv_forward.1} parent=0 // pred_fallthru
    _
  // Predicated region
  $region6: #{odeconv_forward.1} parent=0 // pred_check
    _
  $region7: #{odeconv_forward.1} parent=0 // pred_check_branch
    %21 = sbr.rel (0) target = $region9
  $region8: #{odeconv_forward.1} parent=0 // pred_region
    _
  $region9: #{odeconv_forward.1} parent=0 // pred_fallthru
    _
  // Predicated region
  $region10: #{odeconv_forward.1} parent=0 // pred_check
    _
  $region11: #{odeconv_forward.1} parent=0 // pred_check_branch
    %23 = sbr.rel (0) target = $region13
  $region12: #{odeconv_forward.1} parent=0 // pred_region
    _
  $region13: #{odeconv_forward.1} parent=0 // pred_fallthru
    _
  // Predicated region
  $region14: #{odeconv_forward.1} parent=0 // pred_check
    _
  $region15: #{odeconv_forward.1} parent=0 // pred_check_branch
    %25 = sbr.rel (0) target = $region17
  $region16: #{odeconv_forward.1} parent=0 // pred_region
    _
  $region17: #{odeconv_forward.1} parent=0 // pred_fallthru
    _
  // Predicated region
  $region18: #{odeconv_forward.1} parent=0 // pred_check
    _
  $region19: #{odeconv_forward.1} parent=0 // pred_check_branch
    %27 = sbr.rel (0) target = $region21
  $region20: #{odeconv_forward.1} parent=0 // pred_region
    _
  $region21: #{odeconv_forward.1} parent=0 // pred_fallthru
    _
  // Predicated region
  $region22: #{odeconv_forward.1} parent=0 // pred_check
    _
  $region23: #{odeconv_forward.1} parent=0 // pred_check_branch
    %29 = sbr.rel (0) target = $region25
  $region24: #{odeconv_forward.1} parent=0 // pred_region
    _
  $region25: #{odeconv_forward.1} parent=0 // pred_fallthru
    _
  // Predicated region
  $region26: #{odeconv_forward.1} parent=0 // pred_check
    _
  $region27: #{odeconv_forward.1} parent=0 // pred_check_branch
    %31 = sbr.rel (0) target = $region29
  $region28: #{odeconv_forward.1} parent=0 // pred_region
    _
  $region29: #{odeconv_forward.1} parent=0 // pred_fallthru
    _
  // Predicated region
  $region30: #{odeconv_forward.1} parent=0 // pred_check
    _
  $region31: #{odeconv_forward.1} parent=0 // pred_check_branch
    %33 = sbr.rel (0) target = $region33
  $region32: #{odeconv_forward.1} parent=0 // pred_region
    _
  $region33: #{odeconv_forward.1} parent=0 // pred_fallthru
    _
  // Predicated region
  $region34: #{odeconv_forward.1} parent=0 // pred_check
    _
  $region35: #{odeconv_forward.1} parent=0 // pred_check_branch
    %35 = sbr.rel (0) target = $region37
  $region36: #{odeconv_forward.1} parent=0 // pred_region
    _
  $region37: #{odeconv_forward.1} parent=0 // pred_fallthru
    _
  // Predicated region
  $region38: #{odeconv_forward.1} parent=0 // pred_check
    _
  $region39: #{odeconv_forward.1} parent=0 // pred_check_branch
    %37 = sbr.rel (0) target = $region41
  $region40: #{odeconv_forward.1} parent=0 // pred_region
    _
  $region41: #{odeconv_forward.1} parent=0 // pred_fallthru
    _
  // Predicated region
  $region42: #{odeconv_forward.1} parent=0 // pred_check
    _
  $region43: #{odeconv_forward.1} parent=0 // pred_check_branch
    %39 = sbr.rel (0) target = $region45
  $region44: #{odeconv_forward.1} parent=0 // pred_region
    _
  $region45: #{odeconv_forward.1} parent=0 // pred_fallthru
    _
  // Predicated region
  $region46: #{odeconv_forward.1} parent=0 // pred_check
    _
  $region47: #{odeconv_forward.1} parent=0 // pred_check_branch
    %41 = sbr.rel (0) target = $region49
  $region48: #{odeconv_forward.1} parent=0 // pred_region
    _
  $region49: #{odeconv_forward.1} parent=0 // pred_fallthru
    _
  %s43 = sld [smem:[#allocation3]]
  %v44 = vld [vmem:[%s1] sm:$0x3f]
  %v45 = vld [vmem:[%s1 + $0x8] sm:$0x3f]
  %v46 = vld [vmem:[%s1 + $0x10] sm:$0x3f]
  %v47 = vld [vmem:[%s1 + $0x18] sm:$0x3f]
  %v48 = vld [vmem:[%s8] sm:$0xff]
  %v49 = vld [vmem:[%s8 + $0x8] sm:$0xff]
  %v50 = vld [vmem:[%s8 + $0x10] sm:$0xff]
  %v51 = vld [vmem:[%s8 + $0x18] sm:$0xff]
  %v52 = vld [vmem:[%s8 + $0x20] sm:$0x1]
  %v53 = vld [vmem:[%s8 + $0x28] sm:$0x1]
  %v54 = vld [vmem:[%s8 + $0x30] sm:$0x1]
  %v55 = vld [vmem:[%s8 + $0x38] sm:$0x1]
  %v56 = vld [vmem:[%s3] sm:$0xff]
  %v57 = vld [vmem:[%s3 + $0x8] sm:$0xff]
  %v58 = vld [vmem:[%s3 + $0x10] sm:$0xff]
  %v59 = vld [vmem:[%s3 + $0x18] sm:$0xff]
  %v60 = vstv %s43
  %v61 = vmul.f32 %v60, %v56
  %v62 = vmul.f32 %v60, %v57
  %v63 = vmul.f32 %v60, %v58
  %v64 = vmul.f32 %v60, %v59
  %v65 = vld [vmem:[%s4] sm:$0xff]
  %v66 = vld [vmem:[%s4 + $0x8] sm:$0xff]
  %v67 = vld [vmem:[%s4 + $0x10] sm:$0xff]
  %v68 = vld [vmem:[%s4 + $0x18] sm:$0xff]
  %v69 = vadd.f32 %v61, %v65
  %v70 = vadd.f32 %v62, %v66
  %v71 = vadd.f32 %v63, %v67
  %v72 = vadd.f32 %v64, %v68
  %v73 = vld [vmem:[%s2] sm:$0xff]
  %v74 = vld [vmem:[%s2 + $0x8] sm:$0xff]
  %v75 = vld [vmem:[%s2 + $0x10] sm:$0xff]
  %v76 = vld [vmem:[%s2 + $0x18] sm:$0xff]
  %78 = vset.pattern.permute.xlu0 0
  %79 = vperm.xlu0 %78, %v73
  %v80 = vpop.permute.xlu0 %79
  %83 = vset.pattern.permute.xlu0 0
  %84 = vperm.xlu0 %83, %v74
  %v85 = vpop.permute.xlu0 %84
  %88 = vset.pattern.permute.xlu0 0
  %89 = vperm.xlu0 %88, %v75
  %v90 = vpop.permute.xlu0 %89
  %93 = vset.pattern.permute.xlu0 0
  %94 = vperm.xlu0 %93, %v76
  %v95 = vpop.permute.xlu0 %94
  %v97 = vperm.slane %v44, 0
  %v98 = vperm.slane %v45, 0
  %v99 = vperm.slane %v46, 0
  %v100 = vperm.slane %v47, 0
  %v101 = vmul.f32 %v80, %v97
  %v102 = vmul.f32 %v80, %v98
  %v103 = vmul.f32 %v80, %v99
  %v104 = vmul.f32 %v80, %v100
  %v105 = vmul.f32 %v85, %v97
  %v106 = vmul.f32 %v85, %v98
  %v107 = vmul.f32 %v85, %v99
  %v108 = vmul.f32 %v85, %v100
  %v109 = vmul.f32 %v90, %v97
  %v110 = vmul.f32 %v90, %v98
  %v111 = vmul.f32 %v90, %v99
  %v112 = vmul.f32 %v90, %v100
  %v113 = vmul.f32 %v95, %v97
  %v114 = vmul.f32 %v95, %v98
  %v115 = vmul.f32 %v95, %v99
  %v116 = vmul.f32 %v95, %v100
  %118 = vset.pattern.permute.xlu0 0
  %119 = vperm.xlu0 %118, %v69
  %v120 = vpop.permute.xlu0 %119
  %123 = vset.pattern.permute.xlu0 0
  %124 = vperm.xlu0 %123, %v70
  %v125 = vpop.permute.xlu0 %124
  %128 = vset.pattern.permute.xlu0 0
  %129 = vperm.xlu0 %128, %v71
  %v130 = vpop.permute.xlu0 %129
  %133 = vset.pattern.permute.xlu0 0
  %134 = vperm.xlu0 %133, %v72
  %v135 = vpop.permute.xlu0 %134
  %v137 = vadd.f32 %v120, %v101
  %v138 = vadd.f32 %v120, %v102
  %v139 = vadd.f32 %v120, %v103
  %v140 = vadd.f32 %v120, %v104
  %v141 = vadd.f32 %v125, %v105
  %v142 = vadd.f32 %v125, %v106
  %v143 = vadd.f32 %v125, %v107
  %v144 = vadd.f32 %v125, %v108
  %v145 = vadd.f32 %v130, %v109
  %v146 = vadd.f32 %v130, %v110
  %v147 = vadd.f32 %v130, %v111
  %v148 = vadd.f32 %v130, %v112
  %v149 = vadd.f32 %v135, %v113
  %v150 = vadd.f32 %v135, %v114
  %v151 = vadd.f32 %v135, %v115
  %v152 = vadd.f32 %v135, %v116
  %153 = vset.pattern.permute.xlu0 1
  %154 = vperm.xlu0 %153, %v73
  %v155 = vpop.permute.xlu0 %154
  %157 = vset.pattern.permute.xlu0 1
  %158 = vperm.xlu0 %157, %v74
  %v159 = vpop.permute.xlu0 %158
  %161 = vset.pattern.permute.xlu0 1
  %162 = vperm.xlu0 %161, %v75
  %v163 = vpop.permute.xlu0 %162
  %165 = vset.pattern.permute.xlu0 1
  %166 = vperm.xlu0 %165, %v76
  %v167 = vpop.permute.xlu0 %166
  %v169 = vperm.slane %v44, 1
  %v170 = vperm.slane %v45, 1
  %v171 = vperm.slane %v46, 1
  %v172 = vperm.slane %v47, 1
  %v173 = vmul.f32 %v155, %v169
  %v174 = vmul.f32 %v155, %v170
  %v175 = vmul.f32 %v155, %v171
  %v176 = vmul.f32 %v155, %v172
  %v177 = vmul.f32 %v159, %v169
  %v178 = vmul.f32 %v159, %v170
  %v179 = vmul.f32 %v159, %v171
  %v180 = vmul.f32 %v159, %v172
  %v181 = vmul.f32 %v163, %v169
  %v182 = vmul.f32 %v163, %v170
  %v183 = vmul.f32 %v163, %v171
  %v184 = vmul.f32 %v163, %v172
  %v185 = vmul.f32 %v167, %v169
  %v186 = vmul.f32 %v167, %v170
  %v187 = vmul.f32 %v167, %v171
  %v188 = vmul.f32 %v167, %v172
  %v189 = vadd.f32 %v137, %v173
  %v190 = vadd.f32 %v138, %v174
  %v191 = vadd.f32 %v139, %v175
  %v192 = vadd.f32 %v140, %v176
  %v193 = vadd.f32 %v141, %v177
  %v194 = vadd.f32 %v142, %v178
  %v195 = vadd.f32 %v143, %v179
  %v196 = vadd.f32 %v144, %v180
  %v197 = vadd.f32 %v145, %v181
  %v198 = vadd.f32 %v146, %v182
  %v199 = vadd.f32 %v147, %v183
  %v200 = vadd.f32 %v148, %v184
  %v201 = vadd.f32 %v149, %v185
  %v202 = vadd.f32 %v150, %v186
  %v203 = vadd.f32 %v151, %v187
  %v204 = vadd.f32 %v152, %v188
  %205 = vset.pattern.permute.xlu0 2
  %206 = vperm.xlu0 %205, %v73
  %v207 = vpop.permute.xlu0 %206
  %209 = vset.pattern.permute.xlu0 2
  %210 = vperm.xlu0 %209, %v74
  %v211 = vpop.permute.xlu0 %210
  %213 = vset.pattern.permute.xlu0 2
  %214 = vperm.xlu0 %213, %v75
  %v215 = vpop.permute.xlu0 %214
  %217 = vset.pattern.permute.xlu0 2
  %218 = vperm.xlu0 %217, %v76
  %v219 = vpop.permute.xlu0 %218
  %v221 = vperm.slane %v44, 2
  %v222 = vperm.slane %v45, 2
  %v223 = vperm.slane %v46, 2
  %v224 = vperm.slane %v47, 2
  %v225 = vmul.f32 %v207, %v221
  %v226 = vmul.f32 %v207, %v222
  %v227 = vmul.f32 %v207, %v223
  %v228 = vmul.f32 %v207, %v224
  %v229 = vmul.f32 %v211, %v221
  %v230 = vmul.f32 %v211, %v222
  %v231 = vmul.f32 %v211, %v223
  %v232 = vmul.f32 %v211, %v224
  %v233 = vmul.f32 %v215, %v221
  %v234 = vmul.f32 %v215, %v222
  %v235 = vmul.f32 %v215, %v223
  %v236 = vmul.f32 %v215, %v224
  %v237 = vmul.f32 %v219, %v221
  %v238 = vmul.f32 %v219, %v222
  %v239 = vmul.f32 %v219, %v223
  %v240 = vmul.f32 %v219, %v224
  %v241 = vadd.f32 %v189, %v225
  %v242 = vadd.f32 %v190, %v226
  %v243 = vadd.f32 %v191, %v227
  %v244 = vadd.f32 %v192, %v228
  %v245 = vadd.f32 %v193, %v229
  %v246 = vadd.f32 %v194, %v230
  %v247 = vadd.f32 %v195, %v231
  %v248 = vadd.f32 %v196, %v232
  %v249 = vadd.f32 %v197, %v233
  %v250 = vadd.f32 %v198, %v234
  %v251 = vadd.f32 %v199, %v235
  %v252 = vadd.f32 %v200, %v236
  %v253 = vadd.f32 %v201, %v237
  %v254 = vadd.f32 %v202, %v238
  %v255 = vadd.f32 %v203, %v239
  %v256 = vadd.f32 %v204, %v240
  %257 = vset.pattern.permute.xlu0 3
  %258 = vperm.xlu0 %257, %v73
  %v259 = vpop.permute.xlu0 %258
  %261 = vset.pattern.permute.xlu0 3
  %262 = vperm.xlu0 %261, %v74
  %v263 = vpop.permute.xlu0 %262
  %265 = vset.pattern.permute.xlu0 3
  %266 = vperm.xlu0 %265, %v75
  %v267 = vpop.permute.xlu0 %266
  %269 = vset.pattern.permute.xlu0 3
  %270 = vperm.xlu0 %269, %v76
  %v271 = vpop.permute.xlu0 %270
  %v273 = vperm.slane %v44, 3
  %v274 = vperm.slane %v45, 3
  %v275 = vperm.slane %v46, 3
  %v276 = vperm.slane %v47, 3
  %v277 = vmul.f32 %v259, %v273
  %v278 = vmul.f32 %v259, %v274
  %v279 = vmul.f32 %v259, %v275
  %v280 = vmul.f32 %v259, %v276
  %v281 = vmul.f32 %v263, %v273
  %v282 = vmul.f32 %v263, %v274
  %v283 = vmul.f32 %v263, %v275
  %v284 = vmul.f32 %v263, %v276
  %v285 = vmul.f32 %v267, %v273
  %v286 = vmul.f32 %v267, %v274
  %v287 = vmul.f32 %v267, %v275
  %v288 = vmul.f32 %v267, %v276
  %v289 = vmul.f32 %v271, %v273
  %v290 = vmul.f32 %v271, %v274
  %v291 = vmul.f32 %v271, %v275
  %v292 = vmul.f32 %v271, %v276
  %v293 = vadd.f32 %v241, %v277
  %v294 = vadd.f32 %v242, %v278
  %v295 = vadd.f32 %v243, %v279
  %v296 = vadd.f32 %v244, %v280
  %v297 = vadd.f32 %v245, %v281
  %v298 = vadd.f32 %v246, %v282
  %v299 = vadd.f32 %v247, %v283
  %v300 = vadd.f32 %v248, %v284
  %v301 = vadd.f32 %v249, %v285
  %v302 = vadd.f32 %v250, %v286
  %v303 = vadd.f32 %v251, %v287
  %v304 = vadd.f32 %v252, %v288
  %v305 = vadd.f32 %v253, %v289
  %v306 = vadd.f32 %v254, %v290
  %v307 = vadd.f32 %v255, %v291
  %v308 = vadd.f32 %v256, %v292
  %309 = vset.pattern.permute.xlu0 4
  %310 = vperm.xlu0 %309, %v73
  %v311 = vpop.permute.xlu0 %310
  %313 = vset.pattern.permute.xlu0 4
  %314 = vperm.xlu0 %313, %v74
  %v315 = vpop.permute.xlu0 %314
  %317 = vset.pattern.permute.xlu0 4
  %318 = vperm.xlu0 %317, %v75
  %v319 = vpop.permute.xlu0 %318
  %321 = vset.pattern.permute.xlu0 4
  %322 = vperm.xlu0 %321, %v76
  %v323 = vpop.permute.xlu0 %322
  %v325 = vperm.slane %v44, 4
  %v326 = vperm.slane %v45, 4
  %v327 = vperm.slane %v46, 4
  %v328 = vperm.slane %v47, 4
  %v329 = vmul.f32 %v311, %v325
  %v330 = vmul.f32 %v311, %v326
  %v331 = vmul.f32 %v311, %v327
  %v332 = vmul.f32 %v311, %v328
  %v333 = vmul.f32 %v315, %v325
  %v334 = vmul.f32 %v315, %v326
  %v335 = vmul.f32 %v315, %v327
  %v336 = vmul.f32 %v315, %v328
  %v337 = vmul.f32 %v319, %v325
  %v338 = vmul.f32 %v319, %v326
  %v339 = vmul.f32 %v319, %v327
  %v340 = vmul.f32 %v319, %v328
  %v341 = vmul.f32 %v323, %v325
  %v342 = vmul.f32 %v323, %v326
  %v343 = vmul.f32 %v323, %v327
  %v344 = vmul.f32 %v323, %v328
  %v345 = vadd.f32 %v293, %v329
  %v346 = vadd.f32 %v294, %v330
  %v347 = vadd.f32 %v295, %v331
  %v348 = vadd.f32 %v296, %v332
  %v349 = vadd.f32 %v297, %v333
  %v350 = vadd.f32 %v298, %v334
  %v351 = vadd.f32 %v299, %v335
  %v352 = vadd.f32 %v300, %v336
  %v353 = vadd.f32 %v301, %v337
  %v354 = vadd.f32 %v302, %v338
  %v355 = vadd.f32 %v303, %v339
  %v356 = vadd.f32 %v304, %v340
  %v357 = vadd.f32 %v305, %v341
  %v358 = vadd.f32 %v306, %v342
  %v359 = vadd.f32 %v307, %v343
  %v360 = vadd.f32 %v308, %v344
  %361 = vset.pattern.permute.xlu0 5
  %362 = vperm.xlu0 %361, %v73
  %v363 = vpop.permute.xlu0 %362
  %365 = vset.pattern.permute.xlu0 5
  %366 = vperm.xlu0 %365, %v74
  %v367 = vpop.permute.xlu0 %366
  %369 = vset.pattern.permute.xlu0 5
  %370 = vperm.xlu0 %369, %v75
  %v371 = vpop.permute.xlu0 %370
  %373 = vset.pattern.permute.xlu0 5
  %374 = vperm.xlu0 %373, %v76
  %v375 = vpop.permute.xlu0 %374
  %v377 = vperm.slane %v44, 5
  %v378 = vperm.slane %v45, 5
  %v379 = vperm.slane %v46, 5
  %v380 = vperm.slane %v47, 5
  %v381 = vmul.f32 %v363, %v377
  %v382 = vmul.f32 %v363, %v378
  %v383 = vmul.f32 %v363, %v379
  %v384 = vmul.f32 %v363, %v380
  %v385 = vmul.f32 %v367, %v377
  %v386 = vmul.f32 %v367, %v378
  %v387 = vmul.f32 %v367, %v379
  %v388 = vmul.f32 %v367, %v380
  %v389 = vmul.f32 %v371, %v377
  %v390 = vmul.f32 %v371, %v378
  %v391 = vmul.f32 %v371, %v379
  %v392 = vmul.f32 %v371, %v380
  %v393 = vmul.f32 %v375, %v377
  %v394 = vmul.f32 %v375, %v378
  %v395 = vmul.f32 %v375, %v379
  %v396 = vmul.f32 %v375, %v380
  %v397 = vadd.f32 %v345, %v381
  %v398 = vadd.f32 %v346, %v382
  %v399 = vadd.f32 %v347, %v383
  %v400 = vadd.f32 %v348, %v384
  %v401 = vadd.f32 %v349, %v385
  %v402 = vadd.f32 %v350, %v386
  %v403 = vadd.f32 %v351, %v387
  %v404 = vadd.f32 %v352, %v388
  %v405 = vadd.f32 %v353, %v389
  %v406 = vadd.f32 %v354, %v390
  %v407 = vadd.f32 %v355, %v391
  %v408 = vadd.f32 %v356, %v392
  %v409 = vadd.f32 %v357, %v393
  %v410 = vadd.f32 %v358, %v394
  %v411 = vadd.f32 %v359, %v395
  %v412 = vadd.f32 %v360, %v396
  %v413 = vmax.f32 %v397, 0.0
  %v414 = vmax.f32 %v398, 0.0
  %v415 = vmax.f32 %v399, 0.0
  %v416 = vmax.f32 %v400, 0.0
  %v417 = vmax.f32 %v401, 0.0
  %v418 = vmax.f32 %v402, 0.0
  %v419 = vmax.f32 %v403, 0.0
  %v420 = vmax.f32 %v404, 0.0
  %v421 = vmax.f32 %v405, 0.0
  %v422 = vmax.f32 %v406, 0.0
  %v423 = vmax.f32 %v407, 0.0
  %v424 = vmax.f32 %v408, 0.0
  %v425 = vmax.f32 %v409, 0.0
  %v426 = vmax.f32 %v410, 0.0
  %v427 = vmax.f32 %v411, 0.0
  %v428 = vmax.f32 %v412, 0.0
  %429 = vrot.lane.b32.xlu0 %v413, 17
  %v430 = vpop.permute.xlu0 %429
  %431 = vrot.lane.b32.xlu0 %v417, 17
  %v432 = vpop.permute.xlu0 %431
  %433 = vrot.lane.b32.xlu0 %v421, 17
  %v434 = vpop.permute.xlu0 %433
  %435 = vrot.lane.b32.xlu0 %v425, 17
  %v436 = vpop.permute.xlu0 %435
  %437 = vrot.lane.b32.xlu0 %v414, 17
  %v438 = vpop.permute.xlu0 %437
  %439 = vrot.lane.b32.xlu0 %v418, 17
  %v440 = vpop.permute.xlu0 %439
  %441 = vrot.lane.b32.xlu0 %v422, 17
  %v442 = vpop.permute.xlu0 %441
  %443 = vrot.lane.b32.xlu0 %v426, 17
  %v444 = vpop.permute.xlu0 %443
  %445 = vrot.lane.b32.xlu0 %v415, 17
  %v446 = vpop.permute.xlu0 %445
  %447 = vrot.lane.b32.xlu0 %v419, 17
  %v448 = vpop.permute.xlu0 %447
  %449 = vrot.lane.b32.xlu0 %v423, 17
  %v450 = vpop.permute.xlu0 %449
  %451 = vrot.lane.b32.xlu0 %v427, 17
  %v452 = vpop.permute.xlu0 %451
  %453 = vrot.lane.b32.xlu0 %v416, 17
  %v454 = vpop.permute.xlu0 %453
  %455 = vrot.lane.b32.xlu0 %v420, 17
  %v456 = vpop.permute.xlu0 %455
  %457 = vrot.lane.b32.xlu0 %v424, 17
  %v458 = vpop.permute.xlu0 %457
  %459 = vrot.lane.b32.xlu0 %v428, 17
  %v460 = vpop.permute.xlu0 %459
  %v461 = vlaneseq
  %v462 = vand.u32 %v461, 127
  %vm463 = vcmp.lt.s32.totalorder %v462, 17
  %v464 = vsel %vm463, %v446, %v454
  %v465 = vsel %vm463, %v448, %v456
  %v466 = vsel %vm463, %v450, %v458
  %v467 = vsel %vm463, %v452, %v460
  %v468 = vsel %vm463, %v438, %v446
  %v469 = vsel %vm463, %v440, %v448
  %v470 = vsel %vm463, %v442, %v450
  %v471 = vsel %vm463, %v444, %v452
  %v472 = vsel %vm463, %v430, %v438
  %v473 = vsel %vm463, %v432, %v440
  %v474 = vsel %vm463, %v434, %v442
  %v475 = vsel %vm463, %v436, %v444
  %v476 = vsel %vm463, %v454, %v430
  %v477 = vsel %vm463, %v456, %v432
  %v478 = vsel %vm463, %v458, %v434
  %v479 = vsel %vm463, %v460, %v436
  %v480 = vperm.slane %v48, 0
  %v481 = vperm.slane %v49, 0
  %v482 = vperm.slane %v50, 0
  %v483 = vperm.slane %v51, 0
  %v484 = vmul.f32 %v476, %v480
  %v485 = vmul.f32 %v472, %v481
  %v486 = vmul.f32 %v468, %v482
  %v487 = vmul.f32 %v464, %v483
  %v488 = vmul.f32 %v477, %v480
  %v489 = vmul.f32 %v473, %v481
  %v490 = vmul.f32 %v469, %v482
  %v491 = vmul.f32 %v465, %v483
  %v492 = vmul.f32 %v478, %v480
  %v493 = vmul.f32 %v474, %v481
  %v494 = vmul.f32 %v470, %v482
  %v495 = vmul.f32 %v466, %v483
  %v496 = vmul.f32 %v479, %v480
  %v497 = vmul.f32 %v475, %v481
  %v498 = vmul.f32 %v471, %v482
  %v499 = vmul.f32 %v467, %v483
  %v500 = vpack.c.bf16 %v485, %v484
  %v501 = vpack.c.bf16 %v487, %v486
  %v502 = vpack.c.bf16 %v489, %v488
  %v503 = vpack.c.bf16 %v491, %v490
  %v504 = vpack.c.bf16 %v493, %v492
  %v505 = vpack.c.bf16 %v495, %v494
  %v506 = vpack.c.bf16 %v497, %v496
  %v507 = vpack.c.bf16 %v499, %v498
  %508 = vst [vmem:[#allocation2] sm:$0xff] %v500
  %509 = vst [vmem:[#allocation2 + $0x8] sm:$0xff] %v501
  %510 = vst [vmem:[#allocation2 + $0x10] sm:$0xff] %v502
  %511 = vst [vmem:[#allocation2 + $0x18] sm:$0xff] %v503
  %512 = vst [vmem:[#allocation2 + $0x20] sm:$0xff] %v504
  %513 = vst [vmem:[#allocation2 + $0x28] sm:$0xff] %v505
  %514 = vst [vmem:[#allocation2 + $0x30] sm:$0xff] %v506
  %515 = vst [vmem:[#allocation2 + $0x38] sm:$0xff] %v507
  %516 = vrot.lane.b32.xlu0 %v413, 16
  %v517 = vpop.permute.xlu0 %516
  %518 = vrot.lane.b32.xlu0 %v417, 16
  %v519 = vpop.permute.xlu0 %518
  %520 = vrot.lane.b32.xlu0 %v421, 16
  %v521 = vpop.permute.xlu0 %520
  %522 = vrot.lane.b32.xlu0 %v425, 16
  %v523 = vpop.permute.xlu0 %522
  %524 = vrot.lane.b32.xlu0 %v414, 16
  %v525 = vpop.permute.xlu0 %524
  %526 = vrot.lane.b32.xlu0 %v418, 16
  %v527 = vpop.permute.xlu0 %526
  %528 = vrot.lane.b32.xlu0 %v422, 16
  %v529 = vpop.permute.xlu0 %528
  %530 = vrot.lane.b32.xlu0 %v426, 16
  %v531 = vpop.permute.xlu0 %530
  %532 = vrot.lane.b32.xlu0 %v415, 16
  %v533 = vpop.permute.xlu0 %532
  %534 = vrot.lane.b32.xlu0 %v419, 16
  %v535 = vpop.permute.xlu0 %534
  %536 = vrot.lane.b32.xlu0 %v423, 16
  %v537 = vpop.permute.xlu0 %536
  %538 = vrot.lane.b32.xlu0 %v427, 16
  %v539 = vpop.permute.xlu0 %538
  %540 = vrot.lane.b32.xlu0 %v416, 16
  %v541 = vpop.permute.xlu0 %540
  %542 = vrot.lane.b32.xlu0 %v420, 16
  %v543 = vpop.permute.xlu0 %542
  %544 = vrot.lane.b32.xlu0 %v424, 16
  %v545 = vpop.permute.xlu0 %544
  %546 = vrot.lane.b32.xlu0 %v428, 16
  %v547 = vpop.permute.xlu0 %546
  %vm548 = vcmp.lt.s32.totalorder %v462, 16
  %v549 = vsel %vm548, %v533, %v541
  %v550 = vsel %vm548, %v535, %v543
  %v551 = vsel %vm548, %v537, %v545
  %v552 = vsel %vm548, %v539, %v547
  %v553 = vsel %vm548, %v525, %v533
  %v554 = vsel %vm548, %v527, %v535
  %v555 = vsel %vm548, %v529, %v537
  %v556 = vsel %vm548, %v531, %v539
  %v557 = vsel %vm548, %v517, %v525
  %v558 = vsel %vm548, %v519, %v527
  %v559 = vsel %vm548, %v521, %v529
  %v560 = vsel %vm548, %v523, %v531
  %v561 = vsel %vm548, %v541, %v517
  %v562 = vsel %vm548, %v543, %v519
  %v563 = vsel %vm548, %v545, %v521
  %v564 = vsel %vm548, %v547, %v523
  %v565 = vperm.slane %v48, 1
  %v566 = vperm.slane %v49, 1
  %v567 = vperm.slane %v50, 1
  %v568 = vperm.slane %v51, 1
  %v569 = vmul.f32 %v561, %v565
  %v570 = vmul.f32 %v557, %v566
  %v571 = vmul.f32 %v553, %v567
  %v572 = vmul.f32 %v549, %v568
  %v573 = vmul.f32 %v562, %v565
  %v574 = vmul.f32 %v558, %v566
  %v575 = vmul.f32 %v554, %v567
  %v576 = vmul.f32 %v550, %v568
  %v577 = vmul.f32 %v563, %v565
  %v578 = vmul.f32 %v559, %v566
  %v579 = vmul.f32 %v555, %v567
  %v580 = vmul.f32 %v551, %v568
  %v581 = vmul.f32 %v564, %v565
  %v582 = vmul.f32 %v560, %v566
  %v583 = vmul.f32 %v556, %v567
  %v584 = vmul.f32 %v552, %v568
  %v585 = vpack.c.bf16 %v570, %v569
  %v586 = vpack.c.bf16 %v572, %v571
  %v587 = vpack.c.bf16 %v574, %v573
  %v588 = vpack.c.bf16 %v576, %v575
  %v589 = vpack.c.bf16 %v578, %v577
  %v590 = vpack.c.bf16 %v580, %v579
  %v591 = vpack.c.bf16 %v582, %v581
  %v592 = vpack.c.bf16 %v584, %v583
  %593 = vst [vmem:[#allocation2 + $0x40] sm:$0xff] %v585
  %594 = vst [vmem:[#allocation2 + $0x48] sm:$0xff] %v586
  %595 = vst [vmem:[#allocation2 + $0x50] sm:$0xff] %v587
  %596 = vst [vmem:[#allocation2 + $0x58] sm:$0xff] %v588
  %597 = vst [vmem:[#allocation2 + $0x60] sm:$0xff] %v589
  %598 = vst [vmem:[#allocation2 + $0x68] sm:$0xff] %v590
  %599 = vst [vmem:[#allocation2 + $0x70] sm:$0xff] %v591
  %600 = vst [vmem:[#allocation2 + $0x78] sm:$0xff] %v592
  %601 = vrot.lane.b32.xlu0 %v413, 15
  %v602 = vpop.permute.xlu0 %601
  %603 = vrot.lane.b32.xlu0 %v417, 15
  %v604 = vpop.permute.xlu0 %603
  %605 = vrot.lane.b32.xlu0 %v421, 15
  %v606 = vpop.permute.xlu0 %605
  %607 = vrot.lane.b32.xlu0 %v425, 15
  %v608 = vpop.permute.xlu0 %607
  %609 = vrot.lane.b32.xlu0 %v414, 15
  %v610 = vpop.permute.xlu0 %609
  %611 = vrot.lane.b32.xlu0 %v418, 15
  %v612 = vpop.permute.xlu0 %611
  %613 = vrot.lane.b32.xlu0 %v422, 15
  %v614 = vpop.permute.xlu0 %613
  %615 = vrot.lane.b32.xlu0 %v426, 15
  %v616 = vpop.permute.xlu0 %615
  %617 = vrot.lane.b32.xlu0 %v415, 15
  %v618 = vpop.permute.xlu0 %617
  %619 = vrot.lane.b32.xlu0 %v419, 15
  %v620 = vpop.permute.xlu0 %619
  %621 = vrot.lane.b32.xlu0 %v423, 15
  %v622 = vpop.permute.xlu0 %621
  %623 = vrot.lane.b32.xlu0 %v427, 15
  %v624 = vpop.permute.xlu0 %623
  %625 = vrot.lane.b32.xlu0 %v416, 15
  %v626 = vpop.permute.xlu0 %625
  %627 = vrot.lane.b32.xlu0 %v420, 15
  %v628 = vpop.permute.xlu0 %627
  %629 = vrot.lane.b32.xlu0 %v424, 15
  %v630 = vpop.permute.xlu0 %629
  %631 = vrot.lane.b32.xlu0 %v428, 15
  %v632 = vpop.permute.xlu0 %631
  %vm633 = vcmp.lt.s32.totalorder %v462, 15
  %v634 = vsel %vm633, %v618, %v626
  %v635 = vsel %vm633, %v620, %v628
  %v636 = vsel %vm633, %v622, %v630
  %v637 = vsel %vm633, %v624, %v632
  %v638 = vsel %vm633, %v610, %v618
  %v639 = vsel %vm633, %v612, %v620
  %v640 = vsel %vm633, %v614, %v622
  %v641 = vsel %vm633, %v616, %v624
  %v642 = vsel %vm633, %v602, %v610
  %v643 = vsel %vm633, %v604, %v612
  %v644 = vsel %vm633, %v606, %v614
  %v645 = vsel %vm633, %v608, %v616
  %v646 = vsel %vm633, %v626, %v602
  %v647 = vsel %vm633, %v628, %v604
  %v648 = vsel %vm633, %v630, %v606
  %v649 = vsel %vm633, %v632, %v608
  %v650 = vperm.slane %v48, 2
  %v651 = vperm.slane %v49, 2
  %v652 = vperm.slane %v50, 2
  %v653 = vperm.slane %v51, 2
  %v654 = vmul.f32 %v646, %v650
  %v655 = vmul.f32 %v642, %v651
  %v656 = vmul.f32 %v638, %v652
  %v657 = vmul.f32 %v634, %v653
  %v658 = vmul.f32 %v647, %v650
  %v659 = vmul.f32 %v643, %v651
  %v660 = vmul.f32 %v639, %v652
  %v661 = vmul.f32 %v635, %v653
  %v662 = vmul.f32 %v648, %v650
  %v663 = vmul.f32 %v644, %v651
  %v664 = vmul.f32 %v640, %v652
  %v665 = vmul.f32 %v636, %v653
  %v666 = vmul.f32 %v649, %v650
  %v667 = vmul.f32 %v645, %v651
  %v668 = vmul.f32 %v641, %v652
  %v669 = vmul.f32 %v637, %v653
  %v670 = vpack.c.bf16 %v655, %v654
  %v671 = vpack.c.bf16 %v657, %v656
  %v672 = vpack.c.bf16 %v659, %v658
  %v673 = vpack.c.bf16 %v661, %v660
  %v674 = vpack.c.bf16 %v663, %v662
  %v675 = vpack.c.bf16 %v665, %v664
  %v676 = vpack.c.bf16 %v667, %v666
  %v677 = vpack.c.bf16 %v669, %v668
  %678 = vst [vmem:[#allocation2 + $0x80] sm:$0xff] %v670
  %679 = vst [vmem:[#allocation2 + $0x88] sm:$0xff] %v671
  %680 = vst [vmem:[#allocation2 + $0x90] sm:$0xff] %v672
  %681 = vst [vmem:[#allocation2 + $0x98] sm:$0xff] %v673
  %682 = vst [vmem:[#allocation2 + $0xa0] sm:$0xff] %v674
  %683 = vst [vmem:[#allocation2 + $0xa8] sm:$0xff] %v675
  %684 = vst [vmem:[#allocation2 + $0xb0] sm:$0xff] %v676
  %685 = vst [vmem:[#allocation2 + $0xb8] sm:$0xff] %v677
  %686 = vrot.lane.b32.xlu0 %v413, 1
  %v687 = vpop.permute.xlu0 %686
  %688 = vrot.lane.b32.xlu0 %v417, 1
  %v689 = vpop.permute.xlu0 %688
  %690 = vrot.lane.b32.xlu0 %v421, 1
  %v691 = vpop.permute.xlu0 %690
  %692 = vrot.lane.b32.xlu0 %v425, 1
  %v693 = vpop.permute.xlu0 %692
  %694 = vrot.lane.b32.xlu0 %v414, 1
  %v695 = vpop.permute.xlu0 %694
  %696 = vrot.lane.b32.xlu0 %v418, 1
  %v697 = vpop.permute.xlu0 %696
  %698 = vrot.lane.b32.xlu0 %v422, 1
  %v699 = vpop.permute.xlu0 %698
  %700 = vrot.lane.b32.xlu0 %v426, 1
  %v701 = vpop.permute.xlu0 %700
  %702 = vrot.lane.b32.xlu0 %v415, 1
  %v703 = vpop.permute.xlu0 %702
  %704 = vrot.lane.b32.xlu0 %v419, 1
  %v705 = vpop.permute.xlu0 %704
  %706 = vrot.lane.b32.xlu0 %v423, 1
  %v707 = vpop.permute.xlu0 %706
  %708 = vrot.lane.b32.xlu0 %v427, 1
  %v709 = vpop.permute.xlu0 %708
  %710 = vrot.lane.b32.xlu0 %v416, 1
  %v711 = vpop.permute.xlu0 %710
  %712 = vrot.lane.b32.xlu0 %v420, 1
  %v713 = vpop.permute.xlu0 %712
  %714 = vrot.lane.b32.xlu0 %v424, 1
  %v715 = vpop.permute.xlu0 %714
  %716 = vrot.lane.b32.xlu0 %v428, 1
  %v717 = vpop.permute.xlu0 %716
  %vm718 = vcmp.lt.s32.totalorder %v462, 1
  %v719 = vsel %vm718, %v703, %v711
  %v720 = vsel %vm718, %v705, %v713
  %v721 = vsel %vm718, %v707, %v715
  %v722 = vsel %vm718, %v709, %v717
  %v723 = vsel %vm718, %v695, %v703
  %v724 = vsel %vm718, %v697, %v705
  %v725 = vsel %vm718, %v699, %v707
  %v726 = vsel %vm718, %v701, %v709
  %v727 = vsel %vm718, %v687, %v695
  %v728 = vsel %vm718, %v689, %v697
  %v729 = vsel %vm718, %v691, %v699
  %v730 = vsel %vm718, %v693, %v701
  %v731 = vsel %vm718, %v711, %v687
  %v732 = vsel %vm718, %v713, %v689
  %v733 = vsel %vm718, %v715, %v691
  %v734 = vsel %vm718, %v717, %v693
  %v735 = vperm.slane %v48, 3
  %v736 = vperm.slane %v49, 3
  %v737 = vperm.slane %v50, 3
  %v738 = vperm.slane %v51, 3
  %v739 = vmul.f32 %v731, %v735
  %v740 = vmul.f32 %v727, %v736
  %v741 = vmul.f32 %v723, %v737
  %v742 = vmul.f32 %v719, %v738
  %v743 = vmul.f32 %v732, %v735
  %v744 = vmul.f32 %v728, %v736
  %v745 = vmul.f32 %v724, %v737
  %v746 = vmul.f32 %v720, %v738
  %v747 = vmul.f32 %v733, %v735
  %v748 = vmul.f32 %v729, %v736
  %v749 = vmul.f32 %v725, %v737
  %v750 = vmul.f32 %v721, %v738
  %v751 = vmul.f32 %v734, %v735
  %v752 = vmul.f32 %v730, %v736
  %v753 = vmul.f32 %v726, %v737
  %v754 = vmul.f32 %v722, %v738
  %v755 = vpack.c.bf16 %v740, %v739
  %v756 = vpack.c.bf16 %v742, %v741
  %v757 = vpack.c.bf16 %v744, %v743
  %v758 = vpack.c.bf16 %v746, %v745
  %v759 = vpack.c.bf16 %v748, %v747
  %v760 = vpack.c.bf16 %v750, %v749
  %v761 = vpack.c.bf16 %v752, %v751
  %v762 = vpack.c.bf16 %v754, %v753
  %763 = vst [vmem:[#allocation2 + $0xc0] sm:$0xff] %v755
  %764 = vst [vmem:[#allocation2 + $0xc8] sm:$0xff] %v756
  %765 = vst [vmem:[#allocation2 + $0xd0] sm:$0xff] %v757
  %766 = vst [vmem:[#allocation2 + $0xd8] sm:$0xff] %v758
  %767 = vst [vmem:[#allocation2 + $0xe0] sm:$0xff] %v759
  %768 = vst [vmem:[#allocation2 + $0xe8] sm:$0xff] %v760
  %769 = vst [vmem:[#allocation2 + $0xf0] sm:$0xff] %v761
  %770 = vst [vmem:[#allocation2 + $0xf8] sm:$0xff] %v762
  %v771 = vpack.c.bf16 %v414, %v413
  %v772 = vpack.c.bf16 %v416, %v415
  %v773 = vpack.c.bf16 %v418, %v417
  %v774 = vpack.c.bf16 %v420, %v419
  %v775 = vpack.c.bf16 %v422, %v421
  %v776 = vpack.c.bf16 %v424, %v423
  %v777 = vpack.c.bf16 %v426, %v425
  %v778 = vpack.c.bf16 %v428, %v427
  %779 = vst [vmem:[#allocation2 + $0x100] sm:$0xff] %v771
  %780 = vst [vmem:[#allocation2 + $0x108] sm:$0xff] %v772
  %781 = vst [vmem:[#allocation2 + $0x110] sm:$0xff] %v773
  %782 = vst [vmem:[#allocation2 + $0x118] sm:$0xff] %v774
  %783 = vst [vmem:[#allocation2 + $0x120] sm:$0xff] %v775
  %784 = vst [vmem:[#allocation2 + $0x128] sm:$0xff] %v776
  %785 = vst [vmem:[#allocation2 + $0x130] sm:$0xff] %v777
  %786 = vst [vmem:[#allocation2 + $0x138] sm:$0xff] %v778
  %787 = vrot.lane.b32.xlu0 %v413, 127
  %v788 = vpop.permute.xlu0 %787
  %789 = vrot.lane.b32.xlu0 %v417, 127
  %v790 = vpop.permute.xlu0 %789
  %791 = vrot.lane.b32.xlu0 %v421, 127
  %v792 = vpop.permute.xlu0 %791
  %793 = vrot.lane.b32.xlu0 %v425, 127
  %v794 = vpop.permute.xlu0 %793
  %795 = vrot.lane.b32.xlu0 %v414, 127
  %v796 = vpop.permute.xlu0 %795
  %797 = vrot.lane.b32.xlu0 %v418, 127
  %v798 = vpop.permute.xlu0 %797
  %799 = vrot.lane.b32.xlu0 %v422, 127
  %v800 = vpop.permute.xlu0 %799
  %801 = vrot.lane.b32.xlu0 %v426, 127
  %v802 = vpop.permute.xlu0 %801
  %803 = vrot.lane.b32.xlu0 %v415, 127
  %v804 = vpop.permute.xlu0 %803
  %805 = vrot.lane.b32.xlu0 %v419, 127
  %v806 = vpop.permute.xlu0 %805
  %807 = vrot.lane.b32.xlu0 %v423, 127
  %v808 = vpop.permute.xlu0 %807
  %809 = vrot.lane.b32.xlu0 %v427, 127
  %v810 = vpop.permute.xlu0 %809
  %811 = vrot.lane.b32.xlu0 %v416, 127
  %v812 = vpop.permute.xlu0 %811
  %813 = vrot.lane.b32.xlu0 %v420, 127
  %v814 = vpop.permute.xlu0 %813
  %815 = vrot.lane.b32.xlu0 %v424, 127
  %v816 = vpop.permute.xlu0 %815
  %817 = vrot.lane.b32.xlu0 %v428, 127
  %v818 = vpop.permute.xlu0 %817
  %vm819 = vcmp.lt.s32.totalorder %v462, 127
  %v820 = vsel %vm819, %v804, %v812
  %v821 = vsel %vm819, %v806, %v814
  %v822 = vsel %vm819, %v808, %v816
  %v823 = vsel %vm819, %v810, %v818
  %v824 = vsel %vm819, %v796, %v804
  %v825 = vsel %vm819, %v798, %v806
  %v826 = vsel %vm819, %v800, %v808
  %v827 = vsel %vm819, %v802, %v810
  %v828 = vsel %vm819, %v788, %v796
  %v829 = vsel %vm819, %v790, %v798
  %v830 = vsel %vm819, %v792, %v800
  %v831 = vsel %vm819, %v794, %v802
  %v832 = vsel %vm819, %v812, %v788
  %v833 = vsel %vm819, %v814, %v790
  %v834 = vsel %vm819, %v816, %v792
  %v835 = vsel %vm819, %v818, %v794
  %v836 = vperm.slane %v48, 5
  %v837 = vperm.slane %v49, 5
  %v838 = vperm.slane %v50, 5
  %v839 = vperm.slane %v51, 5
  %v840 = vmul.f32 %v828, %v836
  %v841 = vmul.f32 %v824, %v837
  %v842 = vmul.f32 %v820, %v838
  %v843 = vmul.f32 %v832, %v839
  %v844 = vmul.f32 %v829, %v836
  %v845 = vmul.f32 %v825, %v837
  %v846 = vmul.f32 %v821, %v838
  %v847 = vmul.f32 %v833, %v839
  %v848 = vmul.f32 %v830, %v836
  %v849 = vmul.f32 %v826, %v837
  %v850 = vmul.f32 %v822, %v838
  %v851 = vmul.f32 %v834, %v839
  %v852 = vmul.f32 %v831, %v836
  %v853 = vmul.f32 %v827, %v837
  %v854 = vmul.f32 %v823, %v838
  %v855 = vmul.f32 %v835, %v839
  %v856 = vpack.c.bf16 %v841, %v840
  %v857 = vpack.c.bf16 %v843, %v842
  %v858 = vpack.c.bf16 %v845, %v844
  %v859 = vpack.c.bf16 %v847, %v846
  %v860 = vpack.c.bf16 %v849, %v848
  %v861 = vpack.c.bf16 %v851, %v850
  %v862 = vpack.c.bf16 %v853, %v852
  %v863 = vpack.c.bf16 %v855, %v854
  %864 = vst [vmem:[#allocation2 + $0x140] sm:$0xff] %v856
  %865 = vst [vmem:[#allocation2 + $0x148] sm:$0xff] %v857
  %866 = vst [vmem:[#allocation2 + $0x150] sm:$0xff] %v858
  %867 = vst [vmem:[#allocation2 + $0x158] sm:$0xff] %v859
  %868 = vst [vmem:[#allocation2 + $0x160] sm:$0xff] %v860
  %869 = vst [vmem:[#allocation2 + $0x168] sm:$0xff] %v861
  %870 = vst [vmem:[#allocation2 + $0x170] sm:$0xff] %v862
  %871 = vst [vmem:[#allocation2 + $0x178] sm:$0xff] %v863
  %872 = vrot.lane.b32.xlu0 %v413, 113
  %v873 = vpop.permute.xlu0 %872
  %874 = vrot.lane.b32.xlu0 %v417, 113
  %v875 = vpop.permute.xlu0 %874
  %876 = vrot.lane.b32.xlu0 %v421, 113
  %v877 = vpop.permute.xlu0 %876
  %878 = vrot.lane.b32.xlu0 %v425, 113
  %v879 = vpop.permute.xlu0 %878
  %880 = vrot.lane.b32.xlu0 %v414, 113
  %v881 = vpop.permute.xlu0 %880
  %882 = vrot.lane.b32.xlu0 %v418, 113
  %v883 = vpop.permute.xlu0 %882
  %884 = vrot.lane.b32.xlu0 %v422, 113
  %v885 = vpop.permute.xlu0 %884
  %886 = vrot.lane.b32.xlu0 %v426, 113
  %v887 = vpop.permute.xlu0 %886
  %888 = vrot.lane.b32.xlu0 %v415, 113
  %v889 = vpop.permute.xlu0 %888
  %890 = vrot.lane.b32.xlu0 %v419, 113
  %v891 = vpop.permute.xlu0 %890
  %892 = vrot.lane.b32.xlu0 %v423, 113
  %v893 = vpop.permute.xlu0 %892
  %894 = vrot.lane.b32.xlu0 %v427, 113
  %v895 = vpop.permute.xlu0 %894
  %896 = vrot.lane.b32.xlu0 %v416, 113
  %v897 = vpop.permute.xlu0 %896
  %898 = vrot.lane.b32.xlu0 %v420, 113
  %v899 = vpop.permute.xlu0 %898
  %900 = vrot.lane.b32.xlu0 %v424, 113
  %v901 = vpop.permute.xlu0 %900
  %902 = vrot.lane.b32.xlu0 %v428, 113
  %v903 = vpop.permute.xlu0 %902
  %vm904 = vcmp.lt.s32.totalorder %v462, 113
  %v905 = vsel %vm904, %v889, %v897
  %v906 = vsel %vm904, %v891, %v899
  %v907 = vsel %vm904, %v893, %v901
  %v908 = vsel %vm904, %v895, %v903
  %v909 = vsel %vm904, %v881, %v889
  %v910 = vsel %vm904, %v883, %v891
  %v911 = vsel %vm904, %v885, %v893
  %v912 = vsel %vm904, %v887, %v895
  %v913 = vsel %vm904, %v873, %v881
  %v914 = vsel %vm904, %v875, %v883
  %v915 = vsel %vm904, %v877, %v885
  %v916 = vsel %vm904, %v879, %v887
  %v917 = vsel %vm904, %v897, %v873
  %v918 = vsel %vm904, %v899, %v875
  %v919 = vsel %vm904, %v901, %v877
  %v920 = vsel %vm904, %v903, %v879
  %v921 = vperm.slane %v48, 6
  %v922 = vperm.slane %v49, 6
  %v923 = vperm.slane %v50, 6
  %v924 = vperm.slane %v51, 6
  %v925 = vmul.f32 %v913, %v921
  %v926 = vmul.f32 %v909, %v922
  %v927 = vmul.f32 %v905, %v923
  %v928 = vmul.f32 %v917, %v924
  %v929 = vmul.f32 %v914, %v921
  %v930 = vmul.f32 %v910, %v922
  %v931 = vmul.f32 %v906, %v923
  %v932 = vmul.f32 %v918, %v924
  %v933 = vmul.f32 %v915, %v921
  %v934 = vmul.f32 %v911, %v922
  %v935 = vmul.f32 %v907, %v923
  %v936 = vmul.f32 %v919, %v924
  %v937 = vmul.f32 %v916, %v921
  %v938 = vmul.f32 %v912, %v922
  %v939 = vmul.f32 %v908, %v923
  %v940 = vmul.f32 %v920, %v924
  %v941 = vpack.c.bf16 %v926, %v925
  %v942 = vpack.c.bf16 %v928, %v927
  %v943 = vpack.c.bf16 %v930, %v929
  %v944 = vpack.c.bf16 %v932, %v931
  %v945 = vpack.c.bf16 %v934, %v933
  %v946 = vpack.c.bf16 %v936, %v935
  %v947 = vpack.c.bf16 %v938, %v937
  %v948 = vpack.c.bf16 %v940, %v939
  %949 = vst [vmem:[#allocation2 + $0x180] sm:$0xff] %v941
  %950 = vst [vmem:[#allocation2 + $0x188] sm:$0xff] %v942
  %951 = vst [vmem:[#allocation2 + $0x190] sm:$0xff] %v943
  %952 = vst [vmem:[#allocation2 + $0x198] sm:$0xff] %v944
  %953 = vst [vmem:[#allocation2 + $0x1a0] sm:$0xff] %v945
  %954 = vst [vmem:[#allocation2 + $0x1a8] sm:$0xff] %v946
  %955 = vst [vmem:[#allocation2 + $0x1b0] sm:$0xff] %v947
  %956 = vst [vmem:[#allocation2 + $0x1b8] sm:$0xff] %v948
  %957 = vrot.lane.b32.xlu0 %v413, 112
  %v958 = vpop.permute.xlu0 %957
  %959 = vrot.lane.b32.xlu0 %v417, 112
  %v960 = vpop.permute.xlu0 %959
  %961 = vrot.lane.b32.xlu0 %v421, 112
  %v962 = vpop.permute.xlu0 %961
  %963 = vrot.lane.b32.xlu0 %v425, 112
  %v964 = vpop.permute.xlu0 %963
  %965 = vrot.lane.b32.xlu0 %v414, 112
  %v966 = vpop.permute.xlu0 %965
  %967 = vrot.lane.b32.xlu0 %v418, 112
  %v968 = vpop.permute.xlu0 %967
  %969 = vrot.lane.b32.xlu0 %v422, 112
  %v970 = vpop.permute.xlu0 %969
  %971 = vrot.lane.b32.xlu0 %v426, 112
  %v972 = vpop.permute.xlu0 %971
  %973 = vrot.lane.b32.xlu0 %v415, 112
  %v974 = vpop.permute.xlu0 %973
  %975 = vrot.lane.b32.xlu0 %v419, 112
  %v976 = vpop.permute.xlu0 %975
  %977 = vrot.lane.b32.xlu0 %v423, 112
  %v978 = vpop.permute.xlu0 %977
  %979 = vrot.lane.b32.xlu0 %v427, 112
  %v980 = vpop.permute.xlu0 %979
  %981 = vrot.lane.b32.xlu0 %v416, 112
  %v982 = vpop.permute.xlu0 %981
  %983 = vrot.lane.b32.xlu0 %v420, 112
  %v984 = vpop.permute.xlu0 %983
  %985 = vrot.lane.b32.xlu0 %v424, 112
  %v986 = vpop.permute.xlu0 %985
  %987 = vrot.lane.b32.xlu0 %v428, 112
  %v988 = vpop.permute.xlu0 %987
  %vm989 = vcmp.lt.s32.totalorder %v462, 112
  %v990 = vsel %vm989, %v974, %v982
  %v991 = vsel %vm989, %v976, %v984
  %v992 = vsel %vm989, %v978, %v986
  %v993 = vsel %vm989, %v980, %v988
  %v994 = vsel %vm989, %v966, %v974
  %v995 = vsel %vm989, %v968, %v976
  %v996 = vsel %vm989, %v970, %v978
  %v997 = vsel %vm989, %v972, %v980
  %v998 = vsel %vm989, %v958, %v966
  %v999 = vsel %vm989, %v960, %v968
  %v1000 = vsel %vm989, %v962, %v970
  %v1001 = vsel %vm989, %v964, %v972
  %v1002 = vsel %vm989, %v982, %v958
  %v1003 = vsel %vm989, %v984, %v960
  %v1004 = vsel %vm989, %v986, %v962
  %v1005 = vsel %vm989, %v988, %v964
  %v1006 = vperm.slane %v48, 7
  %v1007 = vperm.slane %v49, 7
  %v1008 = vperm.slane %v50, 7
  %v1009 = vperm.slane %v51, 7
  %v1010 = vmul.f32 %v998, %v1006
  %v1011 = vmul.f32 %v994, %v1007
  %v1012 = vmul.f32 %v990, %v1008
  %v1013 = vmul.f32 %v1002, %v1009
  %v1014 = vmul.f32 %v999, %v1006
  %v1015 = vmul.f32 %v995, %v1007
  %v1016 = vmul.f32 %v991, %v1008
  %v1017 = vmul.f32 %v1003, %v1009
  %v1018 = vmul.f32 %v1000, %v1006
  %v1019 = vmul.f32 %v996, %v1007
  %v1020 = vmul.f32 %v992, %v1008
  %v1021 = vmul.f32 %v1004, %v1009
  %v1022 = vmul.f32 %v1001, %v1006
  %v1023 = vmul.f32 %v997, %v1007
  %v1024 = vmul.f32 %v993, %v1008
  %v1025 = vmul.f32 %v1005, %v1009
  %v1026 = vpack.c.bf16 %v1011, %v1010
  %v1027 = vpack.c.bf16 %v1013, %v1012
  %v1028 = vpack.c.bf16 %v1015, %v1014
  %v1029 = vpack.c.bf16 %v1017, %v1016
  %v1030 = vpack.c.bf16 %v1019, %v1018
  %v1031 = vpack.c.bf16 %v1021, %v1020
  %v1032 = vpack.c.bf16 %v1023, %v1022
  %v1033 = vpack.c.bf16 %v1025, %v1024
  %1034 = vst [vmem:[#allocation2 + $0x1c0] sm:$0xff] %v1026
  %1035 = vst [vmem:[#allocation2 + $0x1c8] sm:$0xff] %v1027
  %1036 = vst [vmem:[#allocation2 + $0x1d0] sm:$0xff] %v1028
  %1037 = vst [vmem:[#allocation2 + $0x1d8] sm:$0xff] %v1029
  %1038 = vst [vmem:[#allocation2 + $0x1e0] sm:$0xff] %v1030
  %1039 = vst [vmem:[#allocation2 + $0x1e8] sm:$0xff] %v1031
  %1040 = vst [vmem:[#allocation2 + $0x1f0] sm:$0xff] %v1032
  %1041 = vst [vmem:[#allocation2 + $0x1f8] sm:$0xff] %v1033
  %1042 = vrot.lane.b32.xlu0 %v413, 111
  %v1043 = vpop.permute.xlu0 %1042
  %1044 = vrot.lane.b32.xlu0 %v417, 111
  %v1045 = vpop.permute.xlu0 %1044
  %1046 = vrot.lane.b32.xlu0 %v421, 111
  %v1047 = vpop.permute.xlu0 %1046
  %1048 = vrot.lane.b32.xlu0 %v425, 111
  %v1049 = vpop.permute.xlu0 %1048
  %1050 = vrot.lane.b32.xlu0 %v414, 111
  %v1051 = vpop.permute.xlu0 %1050
  %1052 = vrot.lane.b32.xlu0 %v418, 111
  %v1053 = vpop.permute.xlu0 %1052
  %1054 = vrot.lane.b32.xlu0 %v422, 111
  %v1055 = vpop.permute.xlu0 %1054
  %1056 = vrot.lane.b32.xlu0 %v426, 111
  %v1057 = vpop.permute.xlu0 %1056
  %1058 = vrot.lane.b32.xlu0 %v415, 111
  %v1059 = vpop.permute.xlu0 %1058
  %1060 = vrot.lane.b32.xlu0 %v419, 111
  %v1061 = vpop.permute.xlu0 %1060
  %1062 = vrot.lane.b32.xlu0 %v423, 111
  %v1063 = vpop.permute.xlu0 %1062
  %1064 = vrot.lane.b32.xlu0 %v427, 111
  %v1065 = vpop.permute.xlu0 %1064
  %1066 = vrot.lane.b32.xlu0 %v416, 111
  %v1067 = vpop.permute.xlu0 %1066
  %1068 = vrot.lane.b32.xlu0 %v420, 111
  %v1069 = vpop.permute.xlu0 %1068
  %1070 = vrot.lane.b32.xlu0 %v424, 111
  %v1071 = vpop.permute.xlu0 %1070
  %1072 = vrot.lane.b32.xlu0 %v428, 111
  %v1073 = vpop.permute.xlu0 %1072
  %vm1074 = vcmp.lt.s32.totalorder %v462, 111
  %v1075 = vsel %vm1074, %v1059, %v1067
  %v1076 = vsel %vm1074, %v1061, %v1069
  %v1077 = vsel %vm1074, %v1063, %v1071
  %v1078 = vsel %vm1074, %v1065, %v1073
  %v1079 = vsel %vm1074, %v1051, %v1059
  %v1080 = vsel %vm1074, %v1053, %v1061
  %v1081 = vsel %vm1074, %v1055, %v1063
  %v1082 = vsel %vm1074, %v1057, %v1065
  %v1083 = vsel %vm1074, %v1043, %v1051
  %v1084 = vsel %vm1074, %v1045, %v1053
  %v1085 = vsel %vm1074, %v1047, %v1055
  %v1086 = vsel %vm1074, %v1049, %v1057
  %v1087 = vsel %vm1074, %v1067, %v1043
  %v1088 = vsel %vm1074, %v1069, %v1045
  %v1089 = vsel %vm1074, %v1071, %v1047
  %v1090 = vsel %vm1074, %v1073, %v1049
  %v1091 = vperm.slane %v52, 0
  %v1092 = vperm.slane %v53, 0
  %v1093 = vperm.slane %v54, 0
  %v1094 = vperm.slane %v55, 0
  %v1095 = vmul.f32 %v1083, %v1091
  %v1096 = vmul.f32 %v1079, %v1092
  %v1097 = vmul.f32 %v1075, %v1093
  %v1098 = vmul.f32 %v1087, %v1094
  %v1099 = vmul.f32 %v1084, %v1091
  %v1100 = vmul.f32 %v1080, %v1092
  %v1101 = vmul.f32 %v1076, %v1093
  %v1102 = vmul.f32 %v1088, %v1094
  %v1103 = vmul.f32 %v1085, %v1091
  %v1104 = vmul.f32 %v1081, %v1092
  %v1105 = vmul.f32 %v1077, %v1093
  %v1106 = vmul.f32 %v1089, %v1094
  %v1107 = vmul.f32 %v1086, %v1091
  %v1108 = vmul.f32 %v1082, %v1092
  %v1109 = vmul.f32 %v1078, %v1093
  %v1110 = vmul.f32 %v1090, %v1094
  %v1111 = vpack.c.bf16 %v1096, %v1095
  %v1112 = vpack.c.bf16 %v1098, %v1097
  %v1113 = vpack.c.bf16 %v1100, %v1099
  %v1114 = vpack.c.bf16 %v1102, %v1101
  %v1115 = vpack.c.bf16 %v1104, %v1103
  %v1116 = vpack.c.bf16 %v1106, %v1105
  %v1117 = vpack.c.bf16 %v1108, %v1107
  %v1118 = vpack.c.bf16 %v1110, %v1109
  %1119 = vst [vmem:[#allocation2 + $0x200] sm:$0xff] %v1111
  %1120 = vst [vmem:[#allocation2 + $0x208] sm:$0xff] %v1112
  %1121 = vst [vmem:[#allocation2 + $0x210] sm:$0xff] %v1113
  %1122 = vst [vmem:[#allocation2 + $0x218] sm:$0xff] %v1114
  %1123 = vst [vmem:[#allocation2 + $0x220] sm:$0xff] %v1115
  %1124 = vst [vmem:[#allocation2 + $0x228] sm:$0xff] %v1116
  %1125 = vst [vmem:[#allocation2 + $0x230] sm:$0xff] %v1117
  %1126 = vst [vmem:[#allocation2 + $0x238] sm:$0xff] %v1118
  %v1127 = vld [vmem:[%s5] sm:$0xff]
  %v1128 = vld [vmem:[%s5 + $0x8] sm:$0xf]
  %v1129 = vld [vmem:[%s5 + $0xc] sm:$0xff]
  %v1130 = vld [vmem:[%s5 + $0x14] sm:$0xf]
  %v1131 = vld [vmem:[%s5 + $0x18] sm:$0xff]
  %v1132 = vld [vmem:[%s5 + $0x20] sm:$0xf]
  %v1133 = vld [vmem:[%s5 + $0x24] sm:$0xff]
  %v1134 = vld [vmem:[%s5 + $0x2c] sm:$0xf]
  %v1135 = vld [vmem:[#allocation2] sm:$0xff]
  %v1136 = vld [vmem:[#allocation2 + $0x8] sm:$0xff]
  %v1137 = vld [vmem:[#allocation2 + $0x10] sm:$0xff]
  %v1138 = vld [vmem:[#allocation2 + $0x18] sm:$0xff]
  %v1139 = vld [vmem:[#allocation2 + $0x20] sm:$0xff]
  %v1140 = vld [vmem:[#allocation2 + $0x28] sm:$0xff]
  %v1141 = vld [vmem:[#allocation2 + $0x30] sm:$0xff]
  %v1142 = vld [vmem:[#allocation2 + $0x38] sm:$0xff]
  %v1143 = vld [vmem:[#allocation2 + $0x40] sm:$0xff]
  %v1144 = vld [vmem:[#allocation2 + $0x48] sm:$0xff]
  %v1145 = vld [vmem:[#allocation2 + $0x50] sm:$0xff]
  %v1146 = vld [vmem:[#allocation2 + $0x58] sm:$0xff]
  %v1147 = vld [vmem:[#allocation2 + $0x60] sm:$0xff]
  %v1148 = vld [vmem:[#allocation2 + $0x68] sm:$0xff]
  %v1149 = vld [vmem:[#allocation2 + $0x70] sm:$0xff]
  %v1150 = vld [vmem:[#allocation2 + $0x78] sm:$0xff]
  %v1151 = vld [vmem:[#allocation2 + $0x80] sm:$0xff]
  %v1152 = vld [vmem:[#allocation2 + $0x88] sm:$0xff]
  %v1153 = vld [vmem:[#allocation2 + $0x90] sm:$0xff]
  %v1154 = vld [vmem:[#allocation2 + $0x98] sm:$0xff]
  %v1155 = vld [vmem:[#allocation2 + $0xa0] sm:$0xff]
  %v1156 = vld [vmem:[#allocation2 + $0xa8] sm:$0xff]
  %v1157 = vld [vmem:[#allocation2 + $0xb0] sm:$0xff]
  %v1158 = vld [vmem:[#allocation2 + $0xb8] sm:$0xff]
  %v1159 = vld [vmem:[#allocation2 + $0xc0] sm:$0xff]
  %v1160 = vld [vmem:[#allocation2 + $0xc8] sm:$0xff]
  %v1161 = vld [vmem:[#allocation2 + $0xd0] sm:$0xff]
  %v1162 = vld [vmem:[#allocation2 + $0xd8] sm:$0xff]
  %v1163 = vld [vmem:[#allocation2 + $0xe0] sm:$0xff]
  %v1164 = vld [vmem:[#allocation2 + $0xe8] sm:$0xff]
  %v1165 = vld [vmem:[#allocation2 + $0xf0] sm:$0xff]
  %v1166 = vld [vmem:[#allocation2 + $0xf8] sm:$0xff]
  %v1167 = vld [vmem:[#allocation2 + $0x100] sm:$0xff]
  %v1168 = vld [vmem:[#allocation2 + $0x108] sm:$0xff]
  %v1169 = vld [vmem:[#allocation2 + $0x110] sm:$0xff]
  %v1170 = vld [vmem:[#allocation2 + $0x118] sm:$0xff]
  %v1171 = vld [vmem:[#allocation2 + $0x120] sm:$0xff]
  %v1172 = vld [vmem:[#allocation2 + $0x128] sm:$0xff]
  %v1173 = vld [vmem:[#allocation2 + $0x130] sm:$0xff]
  %v1174 = vld [vmem:[#allocation2 + $0x138] sm:$0xff]
  %v1175 = vld [vmem:[#allocation2 + $0x140] sm:$0xff]
  %v1176 = vld [vmem:[#allocation2 + $0x148] sm:$0xff]
  %v1177 = vld [vmem:[#allocation2 + $0x150] sm:$0xff]
  %v1178 = vld [vmem:[#allocation2 + $0x158] sm:$0xff]
  %v1179 = vld [vmem:[#allocation2 + $0x160] sm:$0xff]
  %v1180 = vld [vmem:[#allocation2 + $0x168] sm:$0xff]
  %v1181 = vld [vmem:[#allocation2 + $0x170] sm:$0xff]
  %v1182 = vld [vmem:[#allocation2 + $0x178] sm:$0xff]
  %v1183 = vld [vmem:[#allocation2 + $0x180] sm:$0xff]
  %v1184 = vld [vmem:[#allocation2 + $0x188] sm:$0xff]
  %v1185 = vld [vmem:[#allocation2 + $0x190] sm:$0xff]
  %v1186 = vld [vmem:[#allocation2 + $0x198] sm:$0xff]
  %v1187 = vld [vmem:[#allocation2 + $0x1a0] sm:$0xff]
  %v1188 = vld [vmem:[#allocation2 + $0x1a8] sm:$0xff]
  %v1189 = vld [vmem:[#allocation2 + $0x1b0] sm:$0xff]
  %v1190 = vld [vmem:[#allocation2 + $0x1b8] sm:$0xff]
  %v1191 = vld [vmem:[#allocation2 + $0x1c0] sm:$0xff]
  %v1192 = vld [vmem:[#allocation2 + $0x1c8] sm:$0xff]
  %v1193 = vld [vmem:[#allocation2 + $0x1d0] sm:$0xff]
  %v1194 = vld [vmem:[#allocation2 + $0x1d8] sm:$0xff]
  %v1195 = vld [vmem:[#allocation2 + $0x1e0] sm:$0xff]
  %v1196 = vld [vmem:[#allocation2 + $0x1e8] sm:$0xff]
  %v1197 = vld [vmem:[#allocation2 + $0x1f0] sm:$0xff]
  %v1198 = vld [vmem:[#allocation2 + $0x1f8] sm:$0xff]
  %v1199 = vld [vmem:[#allocation2 + $0x200] sm:$0xff]
  %v1200 = vld [vmem:[#allocation2 + $0x208] sm:$0xff]
  %v1201 = vld [vmem:[#allocation2 + $0x210] sm:$0xff]
  %v1202 = vld [vmem:[#allocation2 + $0x218] sm:$0xff]
  %v1203 = vld [vmem:[#allocation2 + $0x220] sm:$0xff]
  %v1204 = vld [vmem:[#allocation2 + $0x228] sm:$0xff]
  %v1205 = vld [vmem:[#allocation2 + $0x230] sm:$0xff]
  %v1206 = vld [vmem:[#allocation2 + $0x238] sm:$0xff]
  %v1207 = vld [vmem:[%s6] sm:$0xff]
  %v1208 = vld [vmem:[%s6 + $0x8] sm:$0xff]
  %v1209 = vld [vmem:[%s6 + $0x10] sm:$0xff]
  %v1210 = vld [vmem:[%s6 + $0x18] sm:$0xff]
  %v1211 = vmul.f32 %v60, %v1207
  %v1212 = vmul.f32 %v60, %v1208
  %v1213 = vmul.f32 %v60, %v1209
  %v1214 = vmul.f32 %v60, %v1210
  %1216 = vset.pattern.permute.xlu0 0
  %1217 = vperm.xlu0 %1216, %v1211
  %v1218 = vpop.permute.xlu0 %1217
  %1221 = vset.pattern.permute.xlu0 0
  %1222 = vperm.xlu0 %1221, %v1212
  %v1223 = vpop.permute.xlu0 %1222
  %1226 = vset.pattern.permute.xlu0 0
  %1227 = vperm.xlu0 %1226, %v1213
  %v1228 = vpop.permute.xlu0 %1227
  %1231 = vset.pattern.permute.xlu0 0
  %1232 = vperm.xlu0 %1231, %v1214
  %v1233 = vpop.permute.xlu0 %1232
  %v1235 = vmul.f32 %v1218, %v480
  %v1236 = vmul.f32 %v1218, %v481
  %v1237 = vmul.f32 %v1218, %v482
  %v1238 = vmul.f32 %v1218, %v483
  %v1239 = vmul.f32 %v1223, %v480
  %v1240 = vmul.f32 %v1223, %v481
  %v1241 = vmul.f32 %v1223, %v482
  %v1242 = vmul.f32 %v1223, %v483
  %v1243 = vmul.f32 %v1228, %v480
  %v1244 = vmul.f32 %v1228, %v481
  %v1245 = vmul.f32 %v1228, %v482
  %v1246 = vmul.f32 %v1228, %v483
  %v1247 = vmul.f32 %v1233, %v480
  %v1248 = vmul.f32 %v1233, %v481
  %v1249 = vmul.f32 %v1233, %v482
  %v1250 = vmul.f32 %v1233, %v483
  %1251 = vset.pattern.permute.xlu0 1
  %1252 = vperm.xlu0 %1251, %v1211
  %v1253 = vpop.permute.xlu0 %1252
  %1255 = vset.pattern.permute.xlu0 1
  %1256 = vperm.xlu0 %1255, %v1212
  %v1257 = vpop.permute.xlu0 %1256
  %1259 = vset.pattern.permute.xlu0 1
  %1260 = vperm.xlu0 %1259, %v1213
  %v1261 = vpop.permute.xlu0 %1260
  %1263 = vset.pattern.permute.xlu0 1
  %1264 = vperm.xlu0 %1263, %v1214
  %v1265 = vpop.permute.xlu0 %1264
  %v1267 = vmul.f32 %v1253, %v565
  %v1268 = vmul.f32 %v1253, %v566
  %v1269 = vmul.f32 %v1253, %v567
  %v1270 = vmul.f32 %v1253, %v568
  %v1271 = vmul.f32 %v1257, %v565
  %v1272 = vmul.f32 %v1257, %v566
  %v1273 = vmul.f32 %v1257, %v567
  %v1274 = vmul.f32 %v1257, %v568
  %v1275 = vmul.f32 %v1261, %v565
  %v1276 = vmul.f32 %v1261, %v566
  %v1277 = vmul.f32 %v1261, %v567
  %v1278 = vmul.f32 %v1261, %v568
  %v1279 = vmul.f32 %v1265, %v565
  %v1280 = vmul.f32 %v1265, %v566
  %v1281 = vmul.f32 %v1265, %v567
  %v1282 = vmul.f32 %v1265, %v568
  %v1283 = vadd.f32 %v1235, %v1267
  %v1284 = vadd.f32 %v1236, %v1268
  %v1285 = vadd.f32 %v1237, %v1269
  %v1286 = vadd.f32 %v1238, %v1270
  %v1287 = vadd.f32 %v1239, %v1271
  %v1288 = vadd.f32 %v1240, %v1272
  %v1289 = vadd.f32 %v1241, %v1273
  %v1290 = vadd.f32 %v1242, %v1274
  %v1291 = vadd.f32 %v1243, %v1275
  %v1292 = vadd.f32 %v1244, %v1276
  %v1293 = vadd.f32 %v1245, %v1277
  %v1294 = vadd.f32 %v1246, %v1278
  %v1295 = vadd.f32 %v1247, %v1279
  %v1296 = vadd.f32 %v1248, %v1280
  %v1297 = vadd.f32 %v1249, %v1281
  %v1298 = vadd.f32 %v1250, %v1282
  %1299 = vset.pattern.permute.xlu0 2
  %1300 = vperm.xlu0 %1299, %v1211
  %v1301 = vpop.permute.xlu0 %1300
  %1303 = vset.pattern.permute.xlu0 2
  %1304 = vperm.xlu0 %1303, %v1212
  %v1305 = vpop.permute.xlu0 %1304
  %1307 = vset.pattern.permute.xlu0 2
  %1308 = vperm.xlu0 %1307, %v1213
  %v1309 = vpop.permute.xlu0 %1308
  %1311 = vset.pattern.permute.xlu0 2
  %1312 = vperm.xlu0 %1311, %v1214
  %v1313 = vpop.permute.xlu0 %1312
  %v1315 = vmul.f32 %v1301, %v650
  %v1316 = vmul.f32 %v1301, %v651
  %v1317 = vmul.f32 %v1301, %v652
  %v1318 = vmul.f32 %v1301, %v653
  %v1319 = vmul.f32 %v1305, %v650
  %v1320 = vmul.f32 %v1305, %v651
  %v1321 = vmul.f32 %v1305, %v652
  %v1322 = vmul.f32 %v1305, %v653
  %v1323 = vmul.f32 %v1309, %v650
  %v1324 = vmul.f32 %v1309, %v651
  %v1325 = vmul.f32 %v1309, %v652
  %v1326 = vmul.f32 %v1309, %v653
  %v1327 = vmul.f32 %v1313, %v650
  %v1328 = vmul.f32 %v1313, %v651
  %v1329 = vmul.f32 %v1313, %v652
  %v1330 = vmul.f32 %v1313, %v653
  %v1331 = vadd.f32 %v1283, %v1315
  %v1332 = vadd.f32 %v1284, %v1316
  %v1333 = vadd.f32 %v1285, %v1317
  %v1334 = vadd.f32 %v1286, %v1318
  %v1335 = vadd.f32 %v1287, %v1319
  %v1336 = vadd.f32 %v1288, %v1320
  %v1337 = vadd.f32 %v1289, %v1321
  %v1338 = vadd.f32 %v1290, %v1322
  %v1339 = vadd.f32 %v1291, %v1323
  %v1340 = vadd.f32 %v1292, %v1324
  %v1341 = vadd.f32 %v1293, %v1325
  %v1342 = vadd.f32 %v1294, %v1326
  %v1343 = vadd.f32 %v1295, %v1327
  %v1344 = vadd.f32 %v1296, %v1328
  %v1345 = vadd.f32 %v1297, %v1329
  %v1346 = vadd.f32 %v1298, %v1330
  %1347 = vset.pattern.permute.xlu0 3
  %1348 = vperm.xlu0 %1347, %v1211
  %v1349 = vpop.permute.xlu0 %1348
  %1351 = vset.pattern.permute.xlu0 3
  %1352 = vperm.xlu0 %1351, %v1212
  %v1353 = vpop.permute.xlu0 %1352
  %1355 = vset.pattern.permute.xlu0 3
  %1356 = vperm.xlu0 %1355, %v1213
  %v1357 = vpop.permute.xlu0 %1356
  %1359 = vset.pattern.permute.xlu0 3
  %1360 = vperm.xlu0 %1359, %v1214
  %v1361 = vpop.permute.xlu0 %1360
  %v1363 = vmul.f32 %v1349, %v735
  %v1364 = vmul.f32 %v1349, %v736
  %v1365 = vmul.f32 %v1349, %v737
  %v1366 = vmul.f32 %v1349, %v738
  %v1367 = vmul.f32 %v1353, %v735
  %v1368 = vmul.f32 %v1353, %v736
  %v1369 = vmul.f32 %v1353, %v737
  %v1370 = vmul.f32 %v1353, %v738
  %v1371 = vmul.f32 %v1357, %v735
  %v1372 = vmul.f32 %v1357, %v736
  %v1373 = vmul.f32 %v1357, %v737
  %v1374 = vmul.f32 %v1357, %v738
  %v1375 = vmul.f32 %v1361, %v735
  %v1376 = vmul.f32 %v1361, %v736
  %v1377 = vmul.f32 %v1361, %v737
  %v1378 = vmul.f32 %v1361, %v738
  %v1379 = vadd.f32 %v1331, %v1363
  %v1380 = vadd.f32 %v1332, %v1364
  %v1381 = vadd.f32 %v1333, %v1365
  %v1382 = vadd.f32 %v1334, %v1366
  %v1383 = vadd.f32 %v1335, %v1367
  %v1384 = vadd.f32 %v1336, %v1368
  %v1385 = vadd.f32 %v1337, %v1369
  %v1386 = vadd.f32 %v1338, %v1370
  %v1387 = vadd.f32 %v1339, %v1371
  %v1388 = vadd.f32 %v1340, %v1372
  %v1389 = vadd.f32 %v1341, %v1373
  %v1390 = vadd.f32 %v1342, %v1374
  %v1391 = vadd.f32 %v1343, %v1375
  %v1392 = vadd.f32 %v1344, %v1376
  %v1393 = vadd.f32 %v1345, %v1377
  %v1394 = vadd.f32 %v1346, %v1378
  %1395 = vset.pattern.permute.xlu0 4
  %1396 = vperm.xlu0 %1395, %v1211
  %v1397 = vpop.permute.xlu0 %1396
  %1399 = vset.pattern.permute.xlu0 4
  %1400 = vperm.xlu0 %1399, %v1212
  %v1401 = vpop.permute.xlu0 %1400
  %1403 = vset.pattern.permute.xlu0 4
  %1404 = vperm.xlu0 %1403, %v1213
  %v1405 = vpop.permute.xlu0 %1404
  %1407 = vset.pattern.permute.xlu0 4
  %1408 = vperm.xlu0 %1407, %v1214
  %v1409 = vpop.permute.xlu0 %1408
  %v1411 = vperm.slane %v48, 4
  %v1412 = vperm.slane %v49, 4
  %v1413 = vperm.slane %v50, 4
  %v1414 = vperm.slane %v51, 4
  %v1415 = vmul.f32 %v1397, %v1411
  %v1416 = vmul.f32 %v1397, %v1412
  %v1417 = vmul.f32 %v1397, %v1413
  %v1418 = vmul.f32 %v1397, %v1414
  %v1419 = vmul.f32 %v1401, %v1411
  %v1420 = vmul.f32 %v1401, %v1412
  %v1421 = vmul.f32 %v1401, %v1413
  %v1422 = vmul.f32 %v1401, %v1414
  %v1423 = vmul.f32 %v1405, %v1411
  %v1424 = vmul.f32 %v1405, %v1412
  %v1425 = vmul.f32 %v1405, %v1413
  %v1426 = vmul.f32 %v1405, %v1414
  %v1427 = vmul.f32 %v1409, %v1411
  %v1428 = vmul.f32 %v1409, %v1412
  %v1429 = vmul.f32 %v1409, %v1413
  %v1430 = vmul.f32 %v1409, %v1414
  %v1431 = vadd.f32 %v1379, %v1415
  %v1432 = vadd.f32 %v1380, %v1416
  %v1433 = vadd.f32 %v1381, %v1417
  %v1434 = vadd.f32 %v1382, %v1418
  %v1435 = vadd.f32 %v1383, %v1419
  %v1436 = vadd.f32 %v1384, %v1420
  %v1437 = vadd.f32 %v1385, %v1421
  %v1438 = vadd.f32 %v1386, %v1422
  %v1439 = vadd.f32 %v1387, %v1423
  %v1440 = vadd.f32 %v1388, %v1424
  %v1441 = vadd.f32 %v1389, %v1425
  %v1442 = vadd.f32 %v1390, %v1426
  %v1443 = vadd.f32 %v1391, %v1427
  %v1444 = vadd.f32 %v1392, %v1428
  %v1445 = vadd.f32 %v1393, %v1429
  %v1446 = vadd.f32 %v1394, %v1430
  %1447 = vset.pattern.permute.xlu0 5
  %1448 = vperm.xlu0 %1447, %v1211
  %v1449 = vpop.permute.xlu0 %1448
  %1451 = vset.pattern.permute.xlu0 5
  %1452 = vperm.xlu0 %1451, %v1212
  %v1453 = vpop.permute.xlu0 %1452
  %1455 = vset.pattern.permute.xlu0 5
  %1456 = vperm.xlu0 %1455, %v1213
  %v1457 = vpop.permute.xlu0 %1456
  %1459 = vset.pattern.permute.xlu0 5
  %1460 = vperm.xlu0 %1459, %v1214
  %v1461 = vpop.permute.xlu0 %1460
  %v1463 = vmul.f32 %v1449, %v836
  %v1464 = vmul.f32 %v1449, %v837
  %v1465 = vmul.f32 %v1449, %v838
  %v1466 = vmul.f32 %v1449, %v839
  %v1467 = vmul.f32 %v1453, %v836
  %v1468 = vmul.f32 %v1453, %v837
  %v1469 = vmul.f32 %v1453, %v838
  %v1470 = vmul.f32 %v1453, %v839
  %v1471 = vmul.f32 %v1457, %v836
  %v1472 = vmul.f32 %v1457, %v837
  %v1473 = vmul.f32 %v1457, %v838
  %v1474 = vmul.f32 %v1457, %v839
  %v1475 = vmul.f32 %v1461, %v836
  %v1476 = vmul.f32 %v1461, %v837
  %v1477 = vmul.f32 %v1461, %v838
  %v1478 = vmul.f32 %v1461, %v839
  %v1479 = vadd.f32 %v1431, %v1463
  %v1480 = vadd.f32 %v1432, %v1464
  %v1481 = vadd.f32 %v1433, %v1465
  %v1482 = vadd.f32 %v1434, %v1466
  %v1483 = vadd.f32 %v1435, %v1467
  %v1484 = vadd.f32 %v1436, %v1468
  %v1485 = vadd.f32 %v1437, %v1469
  %v1486 = vadd.f32 %v1438, %v1470
  %v1487 = vadd.f32 %v1439, %v1471
  %v1488 = vadd.f32 %v1440, %v1472
  %v1489 = vadd.f32 %v1441, %v1473
  %v1490 = vadd.f32 %v1442, %v1474
  %v1491 = vadd.f32 %v1443, %v1475
  %v1492 = vadd.f32 %v1444, %v1476
  %v1493 = vadd.f32 %v1445, %v1477
  %v1494 = vadd.f32 %v1446, %v1478
  %1495 = vset.pattern.permute.xlu0 6
  %1496 = vperm.xlu0 %1495, %v1211
  %v1497 = vpop.permute.xlu0 %1496
  %1499 = vset.pattern.permute.xlu0 6
  %1500 = vperm.xlu0 %1499, %v1212
  %v1501 = vpop.permute.xlu0 %1500
  %1503 = vset.pattern.permute.xlu0 6
  %1504 = vperm.xlu0 %1503, %v1213
  %v1505 = vpop.permute.xlu0 %1504
  %1507 = vset.pattern.permute.xlu0 6
  %1508 = vperm.xlu0 %1507, %v1214
  %v1509 = vpop.permute.xlu0 %1508
  %v1511 = vmul.f32 %v1497, %v921
  %v1512 = vmul.f32 %v1497, %v922
  %v1513 = vmul.f32 %v1497, %v923
  %v1514 = vmul.f32 %v1497, %v924
  %v1515 = vmul.f32 %v1501, %v921
  %v1516 = vmul.f32 %v1501, %v922
  %v1517 = vmul.f32 %v1501, %v923
  %v1518 = vmul.f32 %v1501, %v924
  %v1519 = vmul.f32 %v1505, %v921
  %v1520 = vmul.f32 %v1505, %v922
  %v1521 = vmul.f32 %v1505, %v923
  %v1522 = vmul.f32 %v1505, %v924
  %v1523 = vmul.f32 %v1509, %v921
  %v1524 = vmul.f32 %v1509, %v922
  %v1525 = vmul.f32 %v1509, %v923
  %v1526 = vmul.f32 %v1509, %v924
  %v1527 = vadd.f32 %v1479, %v1511
  %v1528 = vadd.f32 %v1480, %v1512
  %v1529 = vadd.f32 %v1481, %v1513
  %v1530 = vadd.f32 %v1482, %v1514
  %v1531 = vadd.f32 %v1483, %v1515
  %v1532 = vadd.f32 %v1484, %v1516
  %v1533 = vadd.f32 %v1485, %v1517
  %v1534 = vadd.f32 %v1486, %v1518
  %v1535 = vadd.f32 %v1487, %v1519
  %v1536 = vadd.f32 %v1488, %v1520
  %v1537 = vadd.f32 %v1489, %v1521
  %v1538 = vadd.f32 %v1490, %v1522
  %v1539 = vadd.f32 %v1491, %v1523
  %v1540 = vadd.f32 %v1492, %v1524
  %v1541 = vadd.f32 %v1493, %v1525
  %v1542 = vadd.f32 %v1494, %v1526
  %1543 = vset.pattern.permute.xlu0 7
  %1544 = vperm.xlu0 %1543, %v1211
  %v1545 = vpop.permute.xlu0 %1544
  %1547 = vset.pattern.permute.xlu0 7
  %1548 = vperm.xlu0 %1547, %v1212
  %v1549 = vpop.permute.xlu0 %1548
  %1551 = vset.pattern.permute.xlu0 7
  %1552 = vperm.xlu0 %1551, %v1213
  %v1553 = vpop.permute.xlu0 %1552
  %1555 = vset.pattern.permute.xlu0 7
  %1556 = vperm.xlu0 %1555, %v1214
  %v1557 = vpop.permute.xlu0 %1556
  %v1559 = vmul.f32 %v1545, %v1006
  %v1560 = vmul.f32 %v1545, %v1007
  %v1561 = vmul.f32 %v1545, %v1008
  %v1562 = vmul.f32 %v1545, %v1009
  %v1563 = vmul.f32 %v1549, %v1006
  %v1564 = vmul.f32 %v1549, %v1007
  %v1565 = vmul.f32 %v1549, %v1008
  %v1566 = vmul.f32 %v1549, %v1009
  %v1567 = vmul.f32 %v1553, %v1006
  %v1568 = vmul.f32 %v1553, %v1007
  %v1569 = vmul.f32 %v1553, %v1008
  %v1570 = vmul.f32 %v1553, %v1009
  %v1571 = vmul.f32 %v1557, %v1006
  %v1572 = vmul.f32 %v1557, %v1007
  %v1573 = vmul.f32 %v1557, %v1008
  %v1574 = vmul.f32 %v1557, %v1009
  %v1575 = vadd.f32 %v1527, %v1559
  %v1576 = vadd.f32 %v1528, %v1560
  %v1577 = vadd.f32 %v1529, %v1561
  %v1578 = vadd.f32 %v1530, %v1562
  %v1579 = vadd.f32 %v1531, %v1563
  %v1580 = vadd.f32 %v1532, %v1564
  %v1581 = vadd.f32 %v1533, %v1565
  %v1582 = vadd.f32 %v1534, %v1566
  %v1583 = vadd.f32 %v1535, %v1567
  %v1584 = vadd.f32 %v1536, %v1568
  %v1585 = vadd.f32 %v1537, %v1569
  %v1586 = vadd.f32 %v1538, %v1570
  %v1587 = vadd.f32 %v1539, %v1571
  %v1588 = vadd.f32 %v1540, %v1572
  %v1589 = vadd.f32 %v1541, %v1573
  %v1590 = vadd.f32 %v1542, %v1574
  %1591 = vset.pattern.permute.xlu0 8
  %1592 = vperm.xlu0 %1591, %v1211
  %v1593 = vpop.permute.xlu0 %1592
  %1595 = vset.pattern.permute.xlu0 8
  %1596 = vperm.xlu0 %1595, %v1212
  %v1597 = vpop.permute.xlu0 %1596
  %1599 = vset.pattern.permute.xlu0 8
  %1600 = vperm.xlu0 %1599, %v1213
  %v1601 = vpop.permute.xlu0 %1600
  %1603 = vset.pattern.permute.xlu0 8
  %1604 = vperm.xlu0 %1603, %v1214
  %v1605 = vpop.permute.xlu0 %1604
  %v1607 = vmul.f32 %v1593, %v1091
  %v1608 = vmul.f32 %v1593, %v1092
  %v1609 = vmul.f32 %v1593, %v1093
  %v1610 = vmul.f32 %v1593, %v1094
  %v1611 = vmul.f32 %v1597, %v1091
  %v1612 = vmul.f32 %v1597, %v1092
  %v1613 = vmul.f32 %v1597, %v1093
  %v1614 = vmul.f32 %v1597, %v1094
  %v1615 = vmul.f32 %v1601, %v1091
  %v1616 = vmul.f32 %v1601, %v1092
  %v1617 = vmul.f32 %v1601, %v1093
  %v1618 = vmul.f32 %v1601, %v1094
  %v1619 = vmul.f32 %v1605, %v1091
  %v1620 = vmul.f32 %v1605, %v1092
  %v1621 = vmul.f32 %v1605, %v1093
  %v1622 = vmul.f32 %v1605, %v1094
  %v1623 = vadd.f32 %v1575, %v1607
  %v1624 = vadd.f32 %v1576, %v1608
  %v1625 = vadd.f32 %v1577, %v1609
  %v1626 = vadd.f32 %v1578, %v1610
  %v1627 = vadd.f32 %v1579, %v1611
  %v1628 = vadd.f32 %v1580, %v1612
  %v1629 = vadd.f32 %v1581, %v1613
  %v1630 = vadd.f32 %v1582, %v1614
  %v1631 = vadd.f32 %v1583, %v1615
  %v1632 = vadd.f32 %v1584, %v1616
  %v1633 = vadd.f32 %v1585, %v1617
  %v1634 = vadd.f32 %v1586, %v1618
  %v1635 = vadd.f32 %v1587, %v1619
  %v1636 = vadd.f32 %v1588, %v1620
  %v1637 = vadd.f32 %v1589, %v1621
  %v1638 = vadd.f32 %v1590, %v1622
  %v1647 = vunpack.c.l.b16 %v1127
  %v1648 = vunpack.c.h.b16 %v1127
  %v1649 = vunpack.c.l.b16 %v1128
  %v1650 = vunpack.c.l.b16 %v1129
  %v1651 = vunpack.c.h.b16 %v1129
  %v1652 = vunpack.c.l.b16 %v1130
  %v1653 = vunpack.c.l.b16 %v1131
  %v1654 = vunpack.c.h.b16 %v1131
  %v1655 = vunpack.c.l.b16 %v1132
  %v1656 = vunpack.c.l.b16 %v1133
  %v1657 = vunpack.c.h.b16 %v1133
  %v1658 = vunpack.c.l.b16 %v1134
  %v1659 = vpack.c.b16 %v1650, %v1647
  %v1660 = vpack.c.b16 %v1651, %v1648
  %v1661 = vpack.c.b16 %v1652, %v1649
  %v1662 = vpack.c.b16 %v1656, %v1653
  %v1663 = vpack.c.b16 %v1657, %v1654
  %v1664 = vpack.c.b16 %v1658, %v1655
  %v1741 = vunpack.c.l.b16 %v1135
  %v1742 = vunpack.c.h.b16 %v1135
  %v1743 = vunpack.c.l.b16 %v1136
  %v1744 = vunpack.c.h.b16 %v1136
  %v1745 = vunpack.c.l.b16 %v1137
  %v1746 = vunpack.c.h.b16 %v1137
  %v1747 = vunpack.c.l.b16 %v1138
  %v1748 = vunpack.c.h.b16 %v1138
  %v1749 = vunpack.c.l.b16 %v1139
  %v1750 = vunpack.c.h.b16 %v1139
  %v1751 = vunpack.c.l.b16 %v1140
  %v1752 = vunpack.c.h.b16 %v1140
  %v1753 = vunpack.c.l.b16 %v1141
  %v1754 = vunpack.c.h.b16 %v1141
  %v1755 = vunpack.c.l.b16 %v1142
  %v1756 = vunpack.c.h.b16 %v1142
  %v1757 = vunpack.c.l.b16 %v1143
  %v1758 = vunpack.c.h.b16 %v1143
  %v1759 = vunpack.c.l.b16 %v1144
  %v1760 = vunpack.c.h.b16 %v1144
  %v1761 = vunpack.c.l.b16 %v1145
  %v1762 = vunpack.c.h.b16 %v1145
  %v1763 = vunpack.c.l.b16 %v1146
  %v1764 = vunpack.c.h.b16 %v1146
  %v1765 = vunpack.c.l.b16 %v1147
  %v1766 = vunpack.c.h.b16 %v1147
  %v1767 = vunpack.c.l.b16 %v1148
  %v1768 = vunpack.c.h.b16 %v1148
  %v1769 = vunpack.c.l.b16 %v1149
  %v1770 = vunpack.c.h.b16 %v1149
  %v1771 = vunpack.c.l.b16 %v1150
  %v1772 = vunpack.c.h.b16 %v1150
  %v1773 = vunpack.c.l.b16 %v1151
  %v1774 = vunpack.c.h.b16 %v1151
  %v1775 = vunpack.c.l.b16 %v1152
  %v1776 = vunpack.c.h.b16 %v1152
  %v1777 = vunpack.c.l.b16 %v1153
  %v1778 = vunpack.c.h.b16 %v1153
  %v1779 = vunpack.c.l.b16 %v1154
  %v1780 = vunpack.c.h.b16 %v1154
  %v1781 = vunpack.c.l.b16 %v1155
  %v1782 = vunpack.c.h.b16 %v1155
  %v1783 = vunpack.c.l.b16 %v1156
  %v1784 = vunpack.c.h.b16 %v1156
  %v1785 = vunpack.c.l.b16 %v1157
  %v1786 = vunpack.c.h.b16 %v1157
  %v1787 = vunpack.c.l.b16 %v1158
  %v1788 = vunpack.c.h.b16 %v1158
  %v1789 = vunpack.c.l.b16 %v1159
  %v1790 = vunpack.c.h.b16 %v1159
  %v1791 = vunpack.c.l.b16 %v1160
  %v1792 = vunpack.c.h.b16 %v1160
  %v1793 = vunpack.c.l.b16 %v1161
  %v1794 = vunpack.c.h.b16 %v1161
  %v1795 = vunpack.c.l.b16 %v1162
  %v1796 = vunpack.c.h.b16 %v1162
  %v1797 = vunpack.c.l.b16 %v1163
  %v1798 = vunpack.c.h.b16 %v1163
  %v1799 = vunpack.c.l.b16 %v1164
  %v1800 = vunpack.c.h.b16 %v1164
  %v1801 = vunpack.c.l.b16 %v1165
  %v1802 = vunpack.c.h.b16 %v1165
  %v1803 = vunpack.c.l.b16 %v1166
  %v1804 = vunpack.c.h.b16 %v1166
  %v1805 = vunpack.c.l.b16 %v1167
  %v1806 = vunpack.c.h.b16 %v1167
  %v1807 = vunpack.c.l.b16 %v1168
  %v1808 = vunpack.c.h.b16 %v1168
  %v1809 = vunpack.c.l.b16 %v1169
  %v1810 = vunpack.c.h.b16 %v1169
  %v1811 = vunpack.c.l.b16 %v1170
  %v1812 = vunpack.c.h.b16 %v1170
  %v1813 = vunpack.c.l.b16 %v1171
  %v1814 = vunpack.c.h.b16 %v1171
  %v1815 = vunpack.c.l.b16 %v1172
  %v1816 = vunpack.c.h.b16 %v1172
  %v1817 = vunpack.c.l.b16 %v1173
  %v1818 = vunpack.c.h.b16 %v1173
  %v1819 = vunpack.c.l.b16 %v1174
  %v1820 = vunpack.c.h.b16 %v1174
  %v1821 = vunpack.c.l.b16 %v1175
  %v1822 = vunpack.c.h.b16 %v1175
  %v1823 = vunpack.c.l.b16 %v1176
  %v1824 = vunpack.c.h.b16 %v1176
  %v1825 = vunpack.c.l.b16 %v1177
  %v1826 = vunpack.c.h.b16 %v1177
  %v1827 = vunpack.c.l.b16 %v1178
  %v1828 = vunpack.c.h.b16 %v1178
  %v1829 = vunpack.c.l.b16 %v1179
  %v1830 = vunpack.c.h.b16 %v1179
  %v1831 = vunpack.c.l.b16 %v1180
  %v1832 = vunpack.c.h.b16 %v1180
  %v1833 = vunpack.c.l.b16 %v1181
  %v1834 = vunpack.c.h.b16 %v1181
  %v1835 = vunpack.c.l.b16 %v1182
  %v1836 = vunpack.c.h.b16 %v1182
  %v1837 = vunpack.c.l.b16 %v1183
  %v1838 = vunpack.c.h.b16 %v1183
  %v1839 = vunpack.c.l.b16 %v1184
  %v1840 = vunpack.c.h.b16 %v1184
  %v1841 = vunpack.c.l.b16 %v1185
  %v1842 = vunpack.c.h.b16 %v1185
  %v1843 = vunpack.c.l.b16 %v1186
  %v1844 = vunpack.c.h.b16 %v1186
  %v1845 = vunpack.c.l.b16 %v1187
  %v1846 = vunpack.c.h.b16 %v1187
  %v1847 = vunpack.c.l.b16 %v1188
  %v1848 = vunpack.c.h.b16 %v1188
  %v1849 = vunpack.c.l.b16 %v1189
  %v1850 = vunpack.c.h.b16 %v1189
  %v1851 = vunpack.c.l.b16 %v1190
  %v1852 = vunpack.c.h.b16 %v1190
  %v1853 = vunpack.c.l.b16 %v1191
  %v1854 = vunpack.c.h.b16 %v1191
  %v1855 = vunpack.c.l.b16 %v1192
  %v1856 = vunpack.c.h.b16 %v1192
  %v1857 = vunpack.c.l.b16 %v1193
  %v1858 = vunpack.c.h.b16 %v1193
  %v1859 = vunpack.c.l.b16 %v1194
  %v1860 = vunpack.c.h.b16 %v1194
  %v1861 = vunpack.c.l.b16 %v1195
  %v1862 = vunpack.c.h.b16 %v1195
  %v1863 = vunpack.c.l.b16 %v1196
  %v1864 = vunpack.c.h.b16 %v1196
  %v1865 = vunpack.c.l.b16 %v1197
  %v1866 = vunpack.c.h.b16 %v1197
  %v1867 = vunpack.c.l.b16 %v1198
  %v1868 = vunpack.c.h.b16 %v1198
  %v1869 = vunpack.c.l.b16 %v1199
  %v1870 = vunpack.c.h.b16 %v1199
  %v1871 = vunpack.c.l.b16 %v1200
  %v1872 = vunpack.c.h.b16 %v1200
  %v1873 = vunpack.c.l.b16 %v1201
  %v1874 = vunpack.c.h.b16 %v1201
  %v1875 = vunpack.c.l.b16 %v1202
  %v1876 = vunpack.c.h.b16 %v1202
  %v1877 = vunpack.c.l.b16 %v1203
  %v1878 = vunpack.c.h.b16 %v1203
  %v1879 = vunpack.c.l.b16 %v1204
  %v1880 = vunpack.c.h.b16 %v1204
  %v1881 = vunpack.c.l.b16 %v1205
  %v1882 = vunpack.c.h.b16 %v1205
  %v1883 = vunpack.c.l.b16 %v1206
  %v1884 = vunpack.c.h.b16 %v1206
  %v1885 = vpack.c.b16 %v1745, %v1741
  %v1886 = vpack.c.b16 %v1746, %v1742
  %v1887 = vpack.c.b16 %v1747, %v1743
  %v1888 = vpack.c.b16 %v1748, %v1744
  %v1889 = vpack.c.b16 %v1753, %v1749
  %v1890 = vpack.c.b16 %v1754, %v1750
  %v1891 = vpack.c.b16 %v1755, %v1751
  %v1892 = vpack.c.b16 %v1756, %v1752
  %v1893 = vpack.c.b16 %v1761, %v1757
  %v1894 = vpack.c.b16 %v1762, %v1758
  %v1895 = vpack.c.b16 %v1763, %v1759
  %v1896 = vpack.c.b16 %v1764, %v1760
  %v1897 = vpack.c.b16 %v1769, %v1765
  %v1898 = vpack.c.b16 %v1770, %v1766
  %v1899 = vpack.c.b16 %v1771, %v1767
  %v1900 = vpack.c.b16 %v1772, %v1768
  %v1901 = vpack.c.b16 %v1777, %v1773
  %v1902 = vpack.c.b16 %v1778, %v1774
  %v1903 = vpack.c.b16 %v1779, %v1775
  %v1904 = vpack.c.b16 %v1780, %v1776
  %v1905 = vpack.c.b16 %v1785, %v1781
  %v1906 = vpack.c.b16 %v1786, %v1782
  %v1907 = vpack.c.b16 %v1787, %v1783
  %v1908 = vpack.c.b16 %v1788, %v1784
  %v1909 = vpack.c.b16 %v1793, %v1789
  %v1910 = vpack.c.b16 %v1794, %v1790
  %v1911 = vpack.c.b16 %v1795, %v1791
  %v1912 = vpack.c.b16 %v1796, %v1792
  %v1913 = vpack.c.b16 %v1801, %v1797
  %v1914 = vpack.c.b16 %v1802, %v1798
  %v1915 = vpack.c.b16 %v1803, %v1799
  %v1916 = vpack.c.b16 %v1804, %v1800
  %v1917 = vpack.c.b16 %v1809, %v1805
  %v1918 = vpack.c.b16 %v1810, %v1806
  %v1919 = vpack.c.b16 %v1811, %v1807
  %v1920 = vpack.c.b16 %v1812, %v1808
  %v1921 = vpack.c.b16 %v1817, %v1813
  %v1922 = vpack.c.b16 %v1818, %v1814
  %v1923 = vpack.c.b16 %v1819, %v1815
  %v1924 = vpack.c.b16 %v1820, %v1816
  %v1925 = vpack.c.b16 %v1825, %v1821
  %v1926 = vpack.c.b16 %v1826, %v1822
  %v1927 = vpack.c.b16 %v1827, %v1823
  %v1928 = vpack.c.b16 %v1828, %v1824
  %v1929 = vpack.c.b16 %v1833, %v1829
  %v1930 = vpack.c.b16 %v1834, %v1830
  %v1931 = vpack.c.b16 %v1835, %v1831
  %v1932 = vpack.c.b16 %v1836, %v1832
  %v1933 = vpack.c.b16 %v1841, %v1837
  %v1934 = vpack.c.b16 %v1842, %v1838
  %v1935 = vpack.c.b16 %v1843, %v1839
  %v1936 = vpack.c.b16 %v1844, %v1840
  %v1937 = vpack.c.b16 %v1849, %v1845
  %v1938 = vpack.c.b16 %v1850, %v1846
  %v1939 = vpack.c.b16 %v1851, %v1847
  %v1940 = vpack.c.b16 %v1852, %v1848
  %v1941 = vpack.c.b16 %v1857, %v1853
  %v1942 = vpack.c.b16 %v1858, %v1854
  %v1943 = vpack.c.b16 %v1859, %v1855
  %v1944 = vpack.c.b16 %v1860, %v1856
  %v1945 = vpack.c.b16 %v1865, %v1861
  %v1946 = vpack.c.b16 %v1866, %v1862
  %v1947 = vpack.c.b16 %v1867, %v1863
  %v1948 = vpack.c.b16 %v1868, %v1864
  %v1949 = vpack.c.b16 %v1873, %v1869
  %v1950 = vpack.c.b16 %v1874, %v1870
  %v1951 = vpack.c.b16 %v1875, %v1871
  %v1952 = vpack.c.b16 %v1876, %v1872
  %v1953 = vpack.c.b16 %v1881, %v1877
  %v1954 = vpack.c.b16 %v1882, %v1878
  %v1955 = vpack.c.b16 %v1883, %v1879
  %v1956 = vpack.c.b16 %v1884, %v1880
  %vm2029 = vcmask 261120
  %v2031 = vsel %vm2029, %v1661, 0
  %v2034 = vsel %vm2029, %v1664, 0
  %2036 = vmatpush.bf16.msra.mxu0 %v1913
  %2037 = vmatpush.bf16.msra.mxu0 %v1909
  %2038 = vmatpush.bf16.msra.mxu0 %v1905
  %2039 = vmatpush.bf16.msra.mxu0 %v1901
  %2040 = vmatpush.bf16.msra.mxu0 %v1897
  %2041 = vmatpush.bf16.msra.mxu0 %v1893
  %2042 = vmatpush.bf16.msra.mxu0 %v1889
  %2043 = vmatpush.bf16.msra.mxu0 %v1885
  %2044 = vmatmul.bf16.gmra.mxu0 %v1659
  %v2045 = vpop.f32.mrf.mxu0
  %v2046 = vadd.f32 %v1623, %v2045
  %v2047 = vpop.f32.mrf.mxu0
  %v2048 = vadd.f32 %v1627, %v2047
  %2049 = vmatmul.bf16.gmra.mxu0 %v1662
  %v2050 = vpop.f32.mrf.mxu0
  %v2051 = vadd.f32 %v1631, %v2050
  %v2052 = vpop.f32.mrf.mxu0
  %v2053 = vadd.f32 %v1635, %v2052
  %2054 = vdwg.mxu0
  %2055 = vmatpush.bf16.msra.mxu0 %v1945
  %2056 = vmatpush.bf16.msra.mxu0 %v1941
  %2057 = vmatpush.bf16.msra.mxu0 %v1937
  %2058 = vmatpush.bf16.msra.mxu0 %v1933
  %2059 = vmatpush.bf16.msra.mxu0 %v1929
  %2060 = vmatpush.bf16.msra.mxu0 %v1925
  %2061 = vmatpush.bf16.msra.mxu0 %v1921
  %2062 = vmatpush.bf16.msra.mxu0 %v1917
  %2063 = vmatmul.bf16.gmra.mxu0 %v1660
  %v2064 = vpop.f32.mrf.mxu0
  %v2065 = vadd.f32 %v2046, %v2064
  %v2066 = vpop.f32.mrf.mxu0
  %v2067 = vadd.f32 %v2048, %v2066
  %2068 = vmatmul.bf16.gmra.mxu0 %v1663
  %v2069 = vpop.f32.mrf.mxu0
  %v2070 = vadd.f32 %v2051, %v2069
  %v2071 = vpop.f32.mrf.mxu0
  %v2072 = vadd.f32 %v2053, %v2071
  %2073 = vdwg.mxu0
  %2074 = vmatpush.bf16.msra.mxu0 0
  %2075 = vmatpush.bf16.msra.mxu0 0
  %2076 = vmatpush.bf16.msra.mxu0 0
  %2077 = vmatpush.bf16.msra.mxu0 0
  %2078 = vmatpush.bf16.msra.mxu0 0
  %2079 = vmatpush.bf16.msra.mxu0 0
  %2080 = vmatpush.bf16.msra.mxu0 %v1953
  %2081 = vmatpush.bf16.msra.mxu0 %v1949
  %2082 = vmatmul.bf16.gmra.mxu0 %v2031
  %v2083 = vpop.f32.mrf.mxu0
  %v2084 = vadd.f32 %v2065, %v2083
  %v2085 = vpop.f32.mrf.mxu0
  %v2086 = vadd.f32 %v2067, %v2085
  %2087 = vmatmul.bf16.gmra.mxu0 %v2034
  %v2088 = vpop.f32.mrf.mxu0
  %v2089 = vadd.f32 %v2070, %v2088
  %v2090 = vpop.f32.mrf.mxu0
  %v2091 = vadd.f32 %v2072, %v2090
  %2092 = vdwg.mxu0
  %2093 = vmatpush.bf16.msra.mxu0 %v1914
  %2094 = vmatpush.bf16.msra.mxu0 %v1910
  %2095 = vmatpush.bf16.msra.mxu0 %v1906
  %2096 = vmatpush.bf16.msra.mxu0 %v1902
  %2097 = vmatpush.bf16.msra.mxu0 %v1898
  %2098 = vmatpush.bf16.msra.mxu0 %v1894
  %2099 = vmatpush.bf16.msra.mxu0 %v1890
  %2100 = vmatpush.bf16.msra.mxu0 %v1886
  %2101 = vmatmul.bf16.gmra.mxu0 %v1659
  %v2102 = vpop.f32.mrf.mxu0
  %v2103 = vadd.f32 %v1624, %v2102
  %v2104 = vpop.f32.mrf.mxu0
  %v2105 = vadd.f32 %v1628, %v2104
  %2106 = vmatmul.bf16.gmra.mxu0 %v1662
  %v2107 = vpop.f32.mrf.mxu0
  %v2108 = vadd.f32 %v1632, %v2107
  %v2109 = vpop.f32.mrf.mxu0
  %v2110 = vadd.f32 %v1636, %v2109
  %2111 = vdwg.mxu0
  %2112 = vmatpush.bf16.msra.mxu0 %v1946
  %2113 = vmatpush.bf16.msra.mxu0 %v1942
  %2114 = vmatpush.bf16.msra.mxu0 %v1938
  %2115 = vmatpush.bf16.msra.mxu0 %v1934
  %2116 = vmatpush.bf16.msra.mxu0 %v1930
  %2117 = vmatpush.bf16.msra.mxu0 %v1926
  %2118 = vmatpush.bf16.msra.mxu0 %v1922
  %2119 = vmatpush.bf16.msra.mxu0 %v1918
  %2120 = vmatmul.bf16.gmra.mxu0 %v1660
  %v2121 = vpop.f32.mrf.mxu0
  %v2122 = vadd.f32 %v2103, %v2121
  %v2123 = vpop.f32.mrf.mxu0
  %v2124 = vadd.f32 %v2105, %v2123
  %2125 = vmatmul.bf16.gmra.mxu0 %v1663
  %v2126 = vpop.f32.mrf.mxu0
  %v2127 = vadd.f32 %v2108, %v2126
  %v2128 = vpop.f32.mrf.mxu0
  %v2129 = vadd.f32 %v2110, %v2128
  %2130 = vdwg.mxu0
  %2131 = vmatpush.bf16.msra.mxu0 0
  %2132 = vmatpush.bf16.msra.mxu0 0
  %2133 = vmatpush.bf16.msra.mxu0 0
  %2134 = vmatpush.bf16.msra.mxu0 0
  %2135 = vmatpush.bf16.msra.mxu0 0
  %2136 = vmatpush.bf16.msra.mxu0 0
  %2137 = vmatpush.bf16.msra.mxu0 %v1954
  %2138 = vmatpush.bf16.msra.mxu0 %v1950
  %2139 = vmatmul.bf16.gmra.mxu0 %v2031
  %v2140 = vpop.f32.mrf.mxu0
  %v2141 = vadd.f32 %v2122, %v2140
  %v2142 = vpop.f32.mrf.mxu0
  %v2143 = vadd.f32 %v2124, %v2142
  %2144 = vmatmul.bf16.gmra.mxu0 %v2034
  %v2145 = vpop.f32.mrf.mxu0
  %v2146 = vadd.f32 %v2127, %v2145
  %v2147 = vpop.f32.mrf.mxu0
  %v2148 = vadd.f32 %v2129, %v2147
  %2149 = vdwg.mxu0
  %2150 = vmatpush.bf16.msra.mxu0 %v1915
  %2151 = vmatpush.bf16.msra.mxu0 %v1911
  %2152 = vmatpush.bf16.msra.mxu0 %v1907
  %2153 = vmatpush.bf16.msra.mxu0 %v1903
  %2154 = vmatpush.bf16.msra.mxu0 %v1899
  %2155 = vmatpush.bf16.msra.mxu0 %v1895
  %2156 = vmatpush.bf16.msra.mxu0 %v1891
  %2157 = vmatpush.bf16.msra.mxu0 %v1887
  %2158 = vmatmul.bf16.gmra.mxu0 %v1659
  %v2159 = vpop.f32.mrf.mxu0
  %v2160 = vadd.f32 %v1625, %v2159
  %v2161 = vpop.f32.mrf.mxu0
  %v2162 = vadd.f32 %v1629, %v2161
  %2163 = vmatmul.bf16.gmra.mxu0 %v1662
  %v2164 = vpop.f32.mrf.mxu0
  %v2165 = vadd.f32 %v1633, %v2164
  %v2166 = vpop.f32.mrf.mxu0
  %v2167 = vadd.f32 %v1637, %v2166
  %2168 = vdwg.mxu0
  %2169 = vmatpush.bf16.msra.mxu0 %v1947
  %2170 = vmatpush.bf16.msra.mxu0 %v1943
  %2171 = vmatpush.bf16.msra.mxu0 %v1939
  %2172 = vmatpush.bf16.msra.mxu0 %v1935
  %2173 = vmatpush.bf16.msra.mxu0 %v1931
  %2174 = vmatpush.bf16.msra.mxu0 %v1927
  %2175 = vmatpush.bf16.msra.mxu0 %v1923
  %2176 = vmatpush.bf16.msra.mxu0 %v1919
  %2177 = vmatmul.bf16.gmra.mxu0 %v1660
  %v2178 = vpop.f32.mrf.mxu0
  %v2179 = vadd.f32 %v2160, %v2178
  %v2180 = vpop.f32.mrf.mxu0
  %v2181 = vadd.f32 %v2162, %v2180
  %2182 = vmatmul.bf16.gmra.mxu0 %v1663
  %v2183 = vpop.f32.mrf.mxu0
  %v2184 = vadd.f32 %v2165, %v2183
  %v2185 = vpop.f32.mrf.mxu0
  %v2186 = vadd.f32 %v2167, %v2185
  %2187 = vdwg.mxu0
  %2188 = vmatpush.bf16.msra.mxu0 0
  %2189 = vmatpush.bf16.msra.mxu0 0
  %2190 = vmatpush.bf16.msra.mxu0 0
  %2191 = vmatpush.bf16.msra.mxu0 0
  %2192 = vmatpush.bf16.msra.mxu0 0
  %2193 = vmatpush.bf16.msra.mxu0 0
  %2194 = vmatpush.bf16.msra.mxu0 %v1955
  %2195 = vmatpush.bf16.msra.mxu0 %v1951
  %2196 = vmatmul.bf16.gmra.mxu0 %v2031
  %v2197 = vpop.f32.mrf.mxu0
  %v2198 = vadd.f32 %v2179, %v2197
  %v2199 = vpop.f32.mrf.mxu0
  %v2200 = vadd.f32 %v2181, %v2199
  %2201 = vmatmul.bf16.gmra.mxu0 %v2034
  %v2202 = vpop.f32.mrf.mxu0
  %v2203 = vadd.f32 %v2184, %v2202
  %v2204 = vpop.f32.mrf.mxu0
  %v2205 = vadd.f32 %v2186, %v2204
  %2206 = vdwg.mxu0
  %2207 = vmatpush.bf16.msra.mxu0 %v1916
  %2208 = vmatpush.bf16.msra.mxu0 %v1912
  %2209 = vmatpush.bf16.msra.mxu0 %v1908
  %2210 = vmatpush.bf16.msra.mxu0 %v1904
  %2211 = vmatpush.bf16.msra.mxu0 %v1900
  %2212 = vmatpush.bf16.msra.mxu0 %v1896
  %2213 = vmatpush.bf16.msra.mxu0 %v1892
  %2214 = vmatpush.bf16.msra.mxu0 %v1888
  %2215 = vmatmul.bf16.gmra.mxu0 %v1659
  %v2216 = vpop.f32.mrf.mxu0
  %v2217 = vadd.f32 %v1626, %v2216
  %v2218 = vpop.f32.mrf.mxu0
  %v2219 = vadd.f32 %v1630, %v2218
  %2220 = vmatmul.bf16.gmra.mxu0 %v1662
  %v2221 = vpop.f32.mrf.mxu0
  %v2222 = vadd.f32 %v1634, %v2221
  %v2223 = vpop.f32.mrf.mxu0
  %v2224 = vadd.f32 %v1638, %v2223
  %2225 = vdwg.mxu0
  %2226 = vmatpush.bf16.msra.mxu0 %v1948
  %2227 = vmatpush.bf16.msra.mxu0 %v1944
  %2228 = vmatpush.bf16.msra.mxu0 %v1940
  %2229 = vmatpush.bf16.msra.mxu0 %v1936
  %2230 = vmatpush.bf16.msra.mxu0 %v1932
  %2231 = vmatpush.bf16.msra.mxu0 %v1928
  %2232 = vmatpush.bf16.msra.mxu0 %v1924
  %2233 = vmatpush.bf16.msra.mxu0 %v1920
  %2234 = vmatmul.bf16.gmra.mxu0 %v1660
  %v2235 = vpop.f32.mrf.mxu0
  %v2236 = vadd.f32 %v2217, %v2235
  %v2237 = vpop.f32.mrf.mxu0
  %v2238 = vadd.f32 %v2219, %v2237
  %2239 = vmatmul.bf16.gmra.mxu0 %v1663
  %v2240 = vpop.f32.mrf.mxu0
  %v2241 = vadd.f32 %v2222, %v2240
  %v2242 = vpop.f32.mrf.mxu0
  %v2243 = vadd.f32 %v2224, %v2242
  %2244 = vdwg.mxu0
  %2245 = vmatpush.bf16.msra.mxu0 0
  %2246 = vmatpush.bf16.msra.mxu0 0
  %2247 = vmatpush.bf16.msra.mxu0 0
  %2248 = vmatpush.bf16.msra.mxu0 0
  %2249 = vmatpush.bf16.msra.mxu0 0
  %2250 = vmatpush.bf16.msra.mxu0 0
  %2251 = vmatpush.bf16.msra.mxu0 %v1956
  %2252 = vmatpush.bf16.msra.mxu0 %v1952
  %2253 = vmatmul.bf16.gmra.mxu0 %v2031
  %v2254 = vpop.f32.mrf.mxu0
  %v2255 = vadd.f32 %v2236, %v2254
  %v2256 = vpop.f32.mrf.mxu0
  %v2257 = vadd.f32 %v2238, %v2256
  %2258 = vmatmul.bf16.gmra.mxu0 %v2034
  %v2259 = vpop.f32.mrf.mxu0
  %v2260 = vadd.f32 %v2241, %v2259
  %v2261 = vpop.f32.mrf.mxu0
  %v2262 = vadd.f32 %v2243, %v2261
  %2263 = vdwg.mxu0
  %v2264 = vld [vmem:[%s7] sm:$0xff]
  %v2265 = vld [vmem:[%s7 + $0x8] sm:$0xff]
  %v2266 = vld [vmem:[%s7 + $0x10] sm:$0xff]
  %v2267 = vld [vmem:[%s7 + $0x18] sm:$0xff]
  %2269 = vset.pattern.permute.xlu0 0
  %2270 = vperm.xlu0 %2269, %v2264
  %v2271 = vpop.permute.xlu0 %2270
  %2274 = vset.pattern.permute.xlu0 0
  %2275 = vperm.xlu0 %2274, %v2265
  %v2276 = vpop.permute.xlu0 %2275
  %2279 = vset.pattern.permute.xlu0 0
  %2280 = vperm.xlu0 %2279, %v2266
  %v2281 = vpop.permute.xlu0 %2280
  %2284 = vset.pattern.permute.xlu0 0
  %2285 = vperm.xlu0 %2284, %v2267
  %v2286 = vpop.permute.xlu0 %2285
  %v2288 = vadd.f32 %v2084, %v2271
  %v2289 = vadd.f32 %v2141, %v2271
  %v2290 = vadd.f32 %v2198, %v2271
  %v2291 = vadd.f32 %v2255, %v2271
  %v2292 = vadd.f32 %v2086, %v2276
  %v2293 = vadd.f32 %v2143, %v2276
  %v2294 = vadd.f32 %v2200, %v2276
  %v2295 = vadd.f32 %v2257, %v2276
  %v2296 = vadd.f32 %v2089, %v2281
  %v2297 = vadd.f32 %v2146, %v2281
  %v2298 = vadd.f32 %v2203, %v2281
  %v2299 = vadd.f32 %v2260, %v2281
  %v2300 = vadd.f32 %v2091, %v2286
  %v2301 = vadd.f32 %v2148, %v2286
  %v2302 = vadd.f32 %v2205, %v2286
  %v2303 = vadd.f32 %v2262, %v2286
  %v2304 = vmax.f32 %v2288, 0.0
  %v2305 = vmax.f32 %v2289, 0.0
  %v2306 = vmax.f32 %v2290, 0.0
  %v2307 = vmax.f32 %v2291, 0.0
  %v2308 = vmax.f32 %v2292, 0.0
  %v2309 = vmax.f32 %v2293, 0.0
  %v2310 = vmax.f32 %v2294, 0.0
  %v2311 = vmax.f32 %v2295, 0.0
  %v2312 = vmax.f32 %v2296, 0.0
  %v2313 = vmax.f32 %v2297, 0.0
  %v2314 = vmax.f32 %v2298, 0.0
  %v2315 = vmax.f32 %v2299, 0.0
  %v2316 = vmax.f32 %v2300, 0.0
  %v2317 = vmax.f32 %v2301, 0.0
  %v2318 = vmax.f32 %v2302, 0.0
  %v2319 = vmax.f32 %v2303, 0.0
  %v2320 = vld [vmem:[%s9] sm:$0x7]
  %v2321 = vpack.c.bf16 %v2308, %v2304
  %v2322 = vpack.c.bf16 %v2309, %v2305
  %v2323 = vpack.c.bf16 %v2310, %v2306
  %v2324 = vpack.c.bf16 %v2311, %v2307
  %v2325 = vpack.c.bf16 %v2316, %v2312
  %v2326 = vpack.c.bf16 %v2317, %v2313
  %v2327 = vpack.c.bf16 %v2318, %v2314
  %v2328 = vpack.c.bf16 %v2319, %v2315
  %v2329 = vld [vmem:[%s10] sm:$0x3f]
  %v2330 = vmul.f32 %v60, %v2329
  %2332 = vset.pattern.permute.xlu0 0
  %2333 = vperm.xlu0 %2332, %v2330
  %v2334 = vpop.permute.xlu0 %2333
  %v2337 = vsel %vm2029, %v2320, 0
  %2339 = vmatpush.bf16.msra.mxu0 0
  %2340 = vmatpush.bf16.msra.mxu0 0
  %2341 = vmatpush.bf16.msra.mxu0 0
  %2342 = vmatpush.bf16.msra.mxu0 0
  %2343 = vmatpush.bf16.msra.mxu0 0
  %2344 = vmatpush.bf16.msra.mxu0 0
  %2345 = vmatpush.bf16.msra.mxu0 %v2325
  %2346 = vmatpush.bf16.msra.mxu0 %v2321
  %2347 = vmatmul.bf16.gmra.mxu0 %v2337
  %v2348 = vpop.f32.mrf.mxu0
  %v2349 = vadd.f32 %v2334, %v2348
  %v2350 = vpop.f32.mrf.mxu0
  %2351 = vdwg.mxu0
  %2352 = vmatpush.bf16.msra.mxu0 0
  %2353 = vmatpush.bf16.msra.mxu0 0
  %2354 = vmatpush.bf16.msra.mxu0 0
  %2355 = vmatpush.bf16.msra.mxu0 0
  %2356 = vmatpush.bf16.msra.mxu0 0
  %2357 = vmatpush.bf16.msra.mxu0 0
  %2358 = vmatpush.bf16.msra.mxu0 %v2326
  %2359 = vmatpush.bf16.msra.mxu0 %v2322
  %2360 = vmatmul.bf16.gmra.mxu0 %v2337
  %v2361 = vpop.f32.mrf.mxu0
  %v2362 = vadd.f32 %v2334, %v2361
  %v2363 = vpop.f32.mrf.mxu0
  %2364 = vdwg.mxu0
  %2365 = vmatpush.bf16.msra.mxu0 0
  %2366 = vmatpush.bf16.msra.mxu0 0
  %2367 = vmatpush.bf16.msra.mxu0 0
  %2368 = vmatpush.bf16.msra.mxu0 0
  %2369 = vmatpush.bf16.msra.mxu0 0
  %2370 = vmatpush.bf16.msra.mxu0 0
  %2371 = vmatpush.bf16.msra.mxu0 %v2327
  %2372 = vmatpush.bf16.msra.mxu0 %v2323
  %2373 = vmatmul.bf16.gmra.mxu0 %v2337
  %v2374 = vpop.f32.mrf.mxu0
  %v2375 = vadd.f32 %v2334, %v2374
  %v2376 = vpop.f32.mrf.mxu0
  %2377 = vdwg.mxu0
  %2378 = vmatpush.bf16.msra.mxu0 0
  %2379 = vmatpush.bf16.msra.mxu0 0
  %2380 = vmatpush.bf16.msra.mxu0 0
  %2381 = vmatpush.bf16.msra.mxu0 0
  %2382 = vmatpush.bf16.msra.mxu0 0
  %2383 = vmatpush.bf16.msra.mxu0 0
  %2384 = vmatpush.bf16.msra.mxu0 %v2328
  %2385 = vmatpush.bf16.msra.mxu0 %v2324
  %2386 = vmatmul.bf16.gmra.mxu0 %v2337
  %v2387 = vpop.f32.mrf.mxu0
  %v2388 = vadd.f32 %v2334, %v2387
  %v2389 = vpop.f32.mrf.mxu0
  %2390 = vdwg.mxu0
  %v2391 = vld [vmem:[%s11] sm:$0x3f]
  %2393 = vset.pattern.permute.xlu0 0
  %2394 = vperm.xlu0 %2393, %v2391
  %v2395 = vpop.permute.xlu0 %2394
  %v2397 = vadd.f32 %v2349, %v2395
  %v2398 = vadd.f32 %v2362, %v2395
  %v2399 = vadd.f32 %v2375, %v2395
  %v2400 = vadd.f32 %v2388, %v2395
  %2401 = vst [vmem:[%s12] sm:$0x3f] %v2397
  %2402 = vst [vmem:[%s12 + $0x8] sm:$0x3f] %v2398
  %2403 = vst [vmem:[%s12 + $0x10] sm:$0x3f] %v2399
  %2404 = vst [vmem:[%s12 + $0x18] sm:$0x3f] %v2400
  // Predicated region
  $region50: #{odeconv_forward.1} parent=0 // pred_check
    _
  $region51: #{odeconv_forward.1} parent=0 // pred_check_branch
    %2406 = sbr.rel (0) target = $region53
  $region52: #{odeconv_forward.1} parent=0 // pred_region
    _
  $region53: #{odeconv_forward.1} parent=0 // pred_fallthru
    _
  // Predicated region
  $region54: #{odeconv_forward.1} parent=0 // pred_check
    _
  $region55: #{odeconv_forward.1} parent=0 // pred_check_branch
    %2408 = sbr.rel (0) target = $region57
  $region56: #{odeconv_forward.1} parent=0 // pred_region
    _
  $region57: #{odeconv_forward.1} parent=0 // pred_fallthru
    _

</llo_original>
